<compile_context>
chip_gen: v7x
topology: tpu7x:2x2x1
jax: 0.10.0
libtpu: 0.0.40
codegen_flags: <defaults>
</compile_context>

<pallas_src>
import numpy as np
import jax
import jax.numpy as jnp
from jax import lax
from jax.experimental import pallas as pl
from jax.experimental.pallas import tpu as pltpu

# ----------------------------- configuration -----------------------------
PAD_ID = 0
SEP_ID = 102
VOCAB = 200
B, S, H, C = 2, 16, 32, 5          # batch, seq, hidden, num classes
BS = B * S                         # flattened token count (32)
F = 4 * H                          # FFN intermediate size (=128)
HPAD = 128                         # lane-padded hidden width
CPAD = 128                         # lane-padded class width
SEPS_PER_SEQ = 3
N_SEP = B * SEPS_PER_SEQ           # 6 real SEP tokens
NSEP_PAD = 8                       # padded to a full sublane group
LN_EPS = 1e-12
NEG_INF = -1e9

# Packed weight column layout: each sub-matrix owns a 128-aligned slot.
COL_WQ, COL_WK, COL_WV = 0, 128, 256
COL_WO, COL_W1, COL_W2, COL_WCLS = 384, 512, 640, 768
PACK_W = 896

# slab32 (48, BS) row layout: attention bias then SEP selection rows.
ROW_AB = 0
ROW_SEL = BS
SLAB32_ROWS = 48

# slab128 (24, HPAD) row layout: one-hot labels then packed bias/LN rows.
PROW_BQ, PROW_BK, PROW_BV, PROW_BO = 0, 1, 2, 3
PROW_B1, PROW_B2, PROW_BCLS = 4, 5, 6
PROW_G1, PROW_BE1, PROW_G2, PROW_BE2, PROW_HMASK = 7, 8, 9, 10, 11
PVEC_ROWS = 16
ROW_LBL = 0
ROW_P0 = NSEP_PAD                  # bias/LN rows start here
SLAB128_ROWS = NSEP_PAD + PVEC_ROWS   # 24


# --------------------------- fused forward kernel --------------------------
def fused_tagger_kernel(emb_ref, wbig_ref, slab32_ref, slab128_ref, out_ref):
    x = emb_ref[...]                       # (BS, HPAD) f32, cols >= H are zero
    xb = x.astype(jnp.bfloat16)
    w = wbig_ref[...]                      # (HPAD, PACK_W) bf16 (pre-cast)

    s32 = slab32_ref[...]                  # (48, BS) f32
    attn_bias = s32[ROW_AB:ROW_AB + BS, :]             # (BS, BS)
    sel = s32[ROW_SEL:ROW_SEL + NSEP_PAD, :]            # (NSEP_PAD, BS)

    s128 = slab128_ref[...]                # (24, HPAD) f32
    lbl1h = s128[ROW_LBL:ROW_LBL + NSEP_PAD, :]          # (NSEP_PAD, CPAD)

    def prow(r):                           # (1, HPAD) bias / LN row
        return s128[ROW_P0 + r:ROW_P0 + r + 1, :]

    b_q, b_k, b_v, b_o = prow(PROW_BQ), prow(PROW_BK), prow(PROW_BV), prow(PROW_BO)
    b_1, b_2, b_cls = prow(PROW_B1), prow(PROW_B2), prow(PROW_BCLS)
    g1, be1, g2, be2 = prow(PROW_G1), prow(PROW_BE1), prow(PROW_G2), prow(PROW_BE2)
    hmask = prow(PROW_HMASK)               # 1.0 on the H real columns, else 0

    inv_h = 1.0 / float(H)

    def layer_norm(v, g, beta):            # masked LN over the H real columns
        mu = jnp.sum(v, axis=-1, keepdims=True) * inv_h      # padded cols are 0
        d = v - mu
        dm = d * hmask
        var = jnp.sum(dm * dm, axis=-1, keepdims=True) * inv_h
        # g/beta are zero on padded cols -> output padded cols stay exactly 0
        return d * lax.rsqrt(var + LN_EPS) * g + beta

    # --- fused Q/K/V projection: one (BS,HPAD)x(HPAD,3*HPAD) MXU push,
    #     slices at 128-aligned offsets (no lane relayout) ---
    qkv = jnp.dot(xb, w[:, COL_WQ:COL_WV + HPAD],
                  preferred_element_type=jnp.float32)         # (BS, 3*HPAD)
    q = qkv[:, 0:HPAD] + b_q               # 1/sqrt(H) already folded into Wq/bq
    k = qkv[:, HPAD:2 * HPAD] + b_k
    v = qkv[:, 2 * HPAD:3 * HPAD] + b_v

    # --- self-attention over the flattened batch with block-diagonal +
    #     key-padding additive mask (precomputed once in the wrapper) ---
    scores = lax.dot_general(q.astype(jnp.bfloat16), k.astype(jnp.bfloat16),
                             (((1,), (1,)), ((), ())),
                             preferred_element_type=jnp.float32)   # (BS, BS)
    scores = scores + attn_bias
    scores = scores - jnp.max(scores, axis=-1, keepdims=True)
    p = jnp.exp(scores)
    p = p * pl.reciprocal(jnp.sum(p, axis=-1, keepdims=True), approx=True)

    ctx = jnp.dot(p.astype(jnp.bfloat16), v.astype(jnp.bfloat16),
                  preferred_element_type=jnp.float32)              # (BS, HPAD)
    attn_out = jnp.dot(ctx.astype(jnp.bfloat16), w[:, COL_WO:COL_WO + HPAD],
                       preferred_element_type=jnp.float32) + b_o   # (BS, HPAD)
    h = layer_norm(x + attn_out, g1, be1)

    # --- feed-forward ---
    # TODO(synk): BERT / nn.GELU default is exact erf GELU; tanh approximation
    # kept because erf is not reliably lowered by Mosaic (small deviation only).
    ff = jnp.dot(h.astype(jnp.bfloat16), w[:, COL_W1:COL_W1 + HPAD],
                 preferred_element_type=jnp.float32) + b_1          # (BS, F)
    ff = jax.nn.gelu(ff, approximate=True)
    ff = jnp.dot(ff.astype(jnp.bfloat16), w[:, COL_W2:COL_W2 + HPAD],
                 preferred_element_type=jnp.float32) + b_2          # (BS, HPAD)
    y = layer_norm(h + ff, g2, be2)                                 # (BS, HPAD)

    # --- SEP-token gather as one-hot selection matmul (f32 -> exact) ---
    sep = jnp.dot(sel, y, preferred_element_type=jnp.float32)       # (NSEP_PAD, HPAD)

    # --- classifier (dropout is identity at inference). Padded class columns
    #     have zero weights and -1e9 bias, so softmax / CE are unaffected. ---
    logits = jnp.dot(sep.astype(jnp.bfloat16), w[:, COL_WCLS:COL_WCLS + HPAD],
                     preferred_element_type=jnp.float32) + b_cls    # (NSEP_PAD, CPAD)

    # --- CrossEntropyLoss (mean over the N_SEP real rows) ---
    m = jnp.max(logits, axis=-1, keepdims=True)
    lse = m + jnp.log(jnp.sum(jnp.exp(logits - m), axis=-1, keepdims=True))
    picked = jnp.sum(lbl1h * logits, axis=-1, keepdims=True)        # (NSEP_PAD, 1)
    rowvalid = jnp.sum(lbl1h, axis=-1, keepdims=True)               # 1 real / 0 dummy
    loss = jnp.sum((lse - picked) * rowvalid) * (1.0 / float(N_SEP))

    # Pack the loss into the last (dummy) row of the lane-dense logits slab so
    # the kernel has a single unmasked (8,128) store and one output DMA.
    row_ids = lax.broadcasted_iota(jnp.int32, (NSEP_PAD, CPAD), 0)
    out_ref[...] = jnp.where(row_ids == NSEP_PAD - 1, loss, logits)


def fused_tagger_call(emb, wbig, slab32, slab128):
    return pl.pallas_call(
        fused_tagger_kernel,
        out_shape=jax.ShapeDtypeStruct((NSEP_PAD, CPAD), jnp.float32),
        grid=(1,),
        in_specs=[
            pl.BlockSpec((BS, HPAD), lambda i: (0, 0)),           # embeddings
            pl.BlockSpec((HPAD, PACK_W), lambda i: (0, 0)),       # packed bf16 weights
            pl.BlockSpec((SLAB32_ROWS, BS), lambda i: (0, 0)),    # attn bias + SEP select
            pl.BlockSpec((SLAB128_ROWS, HPAD), lambda i: (0, 0)), # labels + biases + LN
        ],
        out_specs=pl.BlockSpec((NSEP_PAD, CPAD), lambda i: (0, 0)),
        compiler_params=pltpu.CompilerParams(
            dimension_semantics=("arbitrary",)),
    )(emb, wbig, slab32, slab128)


# ----------------------------- parameter init -----------------------------
def init_params(key):
    ks = jax.random.split(key, 12)
    p = {}
    p["embedding"] = 0.02 * jax.random.normal(ks[0], (VOCAB, H), jnp.float32)
    p["wq"] = 0.02 * jax.random.normal(ks[1], (H, H), jnp.float32)
    p["wk"] = 0.02 * jax.random.normal(ks[2], (H, H), jnp.float32)
    p["wv"] = 0.02 * jax.random.normal(ks[3], (H, H), jnp.float32)
    p["wo"] = 0.02 * jax.random.normal(ks[4], (H, H), jnp.float32)
    p["bq"] = jnp.zeros((1, H), jnp.float32)
    p["bk"] = jnp.zeros((1, H), jnp.float32)
    p["bv"] = jnp.zeros((1, H), jnp.float32)
    p["bo"] = jnp.zeros((1, H), jnp.float32)
    p["g1"] = jnp.ones((1, H), jnp.float32)
    p["be1"] = jnp.zeros((1, H), jnp.float32)
    p["w1"] = 0.02 * jax.random.normal(ks[5], (H, F), jnp.float32)
    p["b1"] = jnp.zeros((1, F), jnp.float32)
    p["w2"] = 0.02 * jax.random.normal(ks[6], (F, H), jnp.float32)
    p["b2"] = jnp.zeros((1, H), jnp.float32)
    p["g2"] = jnp.ones((1, H), jnp.float32)
    p["be2"] = jnp.zeros((1, H), jnp.float32)
    p["w_cls"] = 0.02 * jax.random.normal(ks[7], (C, H), jnp.float32)  # (out, in)
    p["b_cls"] = jnp.zeros((1, C), jnp.float32)
    return p


def pack_params(p):
    """One-time packing: padded embedding table, bf16 weight slab, bias/LN rows."""
    scale = 1.0 / np.sqrt(float(H))

    emb_table_pad = jnp.zeros((VOCAB, HPAD), jnp.float32).at[:, :H].set(p["embedding"])

    wbig = jnp.zeros((HPAD, PACK_W), jnp.float32)
    wbig = wbig.at[:H, COL_WQ:COL_WQ + H].set(p["wq"] * scale)   # 1/sqrt(H) folded in
    wbig = wbig.at[:H, COL_WK:COL_WK + H].set(p["wk"])
    wbig = wbig.at[:H, COL_WV:COL_WV + H].set(p["wv"])
    wbig = wbig.at[:H, COL_WO:COL_WO + H].set(p["wo"])
    wbig = wbig.at[:H, COL_W1:COL_W1 + F].set(p["w1"])
    wbig = wbig.at[:F, COL_W2:COL_W2 + H].set(p["w2"])
    wbig = wbig.at[:H, COL_WCLS:COL_WCLS + C].set(p["w_cls"].T)
    wbig = wbig.astype(jnp.bfloat16)   # only ever consumed as bf16 MXU operand

    pvec = jnp.zeros((PVEC_ROWS, HPAD), jnp.float32)
    pvec = pvec.at[PROW_BQ, :H].set(p["bq"][0] * scale)
    pvec = pvec.at[PROW_BK, :H].set(p["bk"][0])
    pvec = pvec.at[PROW_BV, :H].set(p["bv"][0])
    pvec = pvec.at[PROW_BO, :H].set(p["bo"][0])
    pvec = pvec.at[PROW_B1, :F].set(p["b1"][0])
    pvec = pvec.at[PROW_B2, :H].set(p["b2"][0])
    pvec = pvec.at[PROW_BCLS, :].set(NEG_INF)          # mask padded class columns
    pvec = pvec.at[PROW_BCLS, :C].set(p["b_cls"][0])
    pvec = pvec.at[PROW_G1, :H].set(p["g1"][0])
    pvec = pvec.at[PROW_BE1, :H].set(p["be1"][0])
    pvec = pvec.at[PROW_G2, :H].set(p["g2"][0])
    pvec = pvec.at[PROW_BE2, :H].set(p["be2"][0])
    pvec = pvec.at[PROW_HMASK, :H].set(1.0)            # real-hidden-column mask
    return emb_table_pad, wbig, pvec


def prepare_batch(input_ids_np, labels_np, pvec):
    """One-time host-side batch preprocessing (static synthetic inputs)."""
    ids_flat_np = input_ids_np.reshape(-1).astype(np.int32)

    # attention_mask = input_ids != pad_token_id, as a block-diagonal additive
    # bias over the flattened (B*S, B*S) score matrix.
    valid = ids_flat_np != PAD_ID
    batch_id = np.repeat(np.arange(B), S)
    allowed = (batch_id[:, None] == batch_id[None, :]) & valid[None, :]
    attn_bias_np = np.where(allowed, 0.0, NEG_INF).astype(np.float32)

    # sent_sep_embeddings = outputs[0][input_ids == sep_token_id]
    # TODO(synk): boolean-mask selection has dynamic shape; SEP positions are
    # resolved host-side (static synthetic inputs) and expressed as a one-hot
    # selection matrix so the gather happens inside the kernel on the MXU.
    sep_flat = np.flatnonzero(ids_flat_np == SEP_ID)
    assert sep_flat.shape[0] == N_SEP
    sel_np = np.zeros((NSEP_PAD, BS), np.float32)
    sel_np[np.arange(N_SEP), sep_flat] = 1.0

    slab32_np = np.zeros((SLAB32_ROWS, BS), np.float32)
    slab32_np[ROW_AB:ROW_AB + BS] = attn_bias_np
    slab32_np[ROW_SEL:ROW_SEL + NSEP_PAD] = sel_np

    # flat_labels = labels[labels != -100] (row-major order matches SEP order)
    flat_labels_np = labels_np[labels_np != -100].astype(np.int32)
    assert flat_labels_np.shape[0] == N_SEP
    lbl1h_np = np.zeros((NSEP_PAD, HPAD), np.float32)
    lbl1h_np[np.arange(N_SEP), flat_labels_np] = 1.0

    slab128 = jnp.concatenate([jnp.asarray(lbl1h_np), pvec], axis=0)  # (24, 128)
    return (jnp.asarray(ids_flat_np), jnp.asarray(slab32_np), slab128,
            jnp.asarray(flat_labels_np))


# ------------------------------- forward ----------------------------------
@jax.jit
def tagger_forward(ids_flat, emb_table_pad, wbig, slab32, slab128):
    """Per-call path: embedding take + one fused Pallas kernel + tiny slices."""
    emb = jnp.take(emb_table_pad, ids_flat, axis=0)        # (BS, HPAD)
    out = fused_tagger_call(emb, wbig, slab32, slab128)    # (NSEP_PAD, CPAD)
    loss = out[NSEP_PAD - 1, 0]
    logits = out[:N_SEP, :C]
    return loss, logits


# --------------------------------- main ------------------------------------
if __name__ == "__main__":
    key = jax.random.PRNGKey(0)
    params = init_params(key)

    # Deterministic synthetic token ids: real tokens, SEP at fixed positions,
    # PAD at the tail.
    rng = np.random.default_rng(0)
    input_ids_np = rng.integers(1, VOCAB, size=(B, S)).astype(np.int32)
    input_ids_np[input_ids_np == SEP_ID] = 103          # keep SEPs only where placed
    sep_positions = [4, 8, 12]
    for b in range(B):
        for pos in sep_positions:
            input_ids_np[b, pos] = SEP_ID
        input_ids_np[b, 13:] = PAD_ID                    # padding tail

    # Labels: -100 everywhere except at SEP positions.
    labels_np = np.full((B, S), -100, dtype=np.int32)
    for b in range(B):
        for j, pos in enumerate(sep_positions):
            labels_np[b, pos] = (b + j) % C

    # One-time packing / preprocessing (hoisted out of the per-call path).
    emb_table_pad, wbig, pvec = pack_params(params)
    ids_flat, slab32, slab128, flat_labels = prepare_batch(input_ids_np, labels_np, pvec)

    # First call compiles; second call is pure device work from the jit cache.
    loss, logits = tagger_forward(ids_flat, emb_table_pad, wbig, slab32, slab128)
    jax.block_until_ready((loss, logits))
    loss, logits = tagger_forward(ids_flat, emb_table_pad, wbig, slab32, slab128)
    jax.block_until_ready((loss, logits))

    assert logits.shape == (N_SEP, C)
    assert flat_labels.shape == (N_SEP,)
    assert np.isfinite(float(loss))
    assert np.all(np.isfinite(np.asarray(logits)))
    print("KERNEL_OK")
</pallas_src>

<mosaic_0001>
module attributes {stable_mosaic.version = 11 : i64} {
  func.func @fused_tagger_kernel(%arg0: i32, %arg1: memref<32x128xf32, #tpu.memory_space<vmem>>, %arg2: memref<128x896xbf16, #tpu.memory_space<vmem>>, %arg3: memref<48x32xf32, #tpu.memory_space<vmem>>, %arg4: memref<24x128xf32, #tpu.memory_space<vmem>>, %arg5: memref<8x128xf32, #tpu.memory_space<vmem>>) attributes {dimension_semantics = [#tpu.dimension_semantics<arbitrary>], iteration_bounds = array<i64: 1>, scalar_prefetch = 0 : i64, scratch_operands = 0 : i64, tpu.core_type = #tpu.core_type<tc>, window_params = [{pipeline_mode = #tpu.pipeline_mode<synchronous>, transform_indices = @transform_0, window_bounds = array<i64: 32, 128>}, {pipeline_mode = #tpu.pipeline_mode<synchronous>, transform_indices = @transform_1, window_bounds = array<i64: 128, 896>}, {pipeline_mode = #tpu.pipeline_mode<synchronous>, transform_indices = @transform_2, window_bounds = array<i64: 48, 32>}, {pipeline_mode = #tpu.pipeline_mode<synchronous>, transform_indices = @transform_3, window_bounds = array<i64: 24, 128>}, {pipeline_mode = #tpu.pipeline_mode<synchronous>, transform_indices = @transform_4, window_bounds = array<i64: 8, 128>}]} {
    %c0 = arith.constant 0 : index
    %c0_0 = arith.constant 0 : index
    %0 = vector.load %arg1[%c0, %c0_0] : memref<32x128xf32, #tpu.memory_space<vmem>>, vector<32x128xf32>
    %1 = arith.truncf %0 : vector<32x128xf32> to vector<32x128xbf16>
    %c0_1 = arith.constant 0 : index
    %c0_2 = arith.constant 0 : index
    %2 = vector.load %arg2[%c0_1, %c0_2] : memref<128x896xbf16, #tpu.memory_space<vmem>>, vector<128x896xbf16>
    %c0_3 = arith.constant 0 : index
    %c0_4 = arith.constant 0 : index
    %3 = vector.load %arg3[%c0_3, %c0_4] : memref<48x32xf32, #tpu.memory_space<vmem>>, vector<48x32xf32>
    %4 = vector.extract_strided_slice %3 {offsets = [0, 0], sizes = [32, 32], strides = [1, 1]} : vector<48x32xf32> to vector<32x32xf32>
    %5 = vector.extract_strided_slice %3 {offsets = [32, 0], sizes = [8, 32], strides = [1, 1]} : vector<48x32xf32> to vector<8x32xf32>
    %c0_5 = arith.constant 0 : index
    %c0_6 = arith.constant 0 : index
    %6 = vector.load %arg4[%c0_5, %c0_6] : memref<24x128xf32, #tpu.memory_space<vmem>>, vector<24x128xf32>
    %7 = vector.extract_strided_slice %6 {offsets = [0, 0], sizes = [8, 128], strides = [1, 1]} : vector<24x128xf32> to vector<8x128xf32>
    %8 = vector.extract_strided_slice %6 {offsets = [8, 0], sizes = [1, 128], strides = [1, 1]} : vector<24x128xf32> to vector<1x128xf32>
    %9 = vector.extract_strided_slice %6 {offsets = [9, 0], sizes = [1, 128], strides = [1, 1]} : vector<24x128xf32> to vector<1x128xf32>
    %10 = vector.extract_strided_slice %6 {offsets = [10, 0], sizes = [1, 128], strides = [1, 1]} : vector<24x128xf32> to vector<1x128xf32>
    %11 = vector.extract_strided_slice %6 {offsets = [11, 0], sizes = [1, 128], strides = [1, 1]} : vector<24x128xf32> to vector<1x128xf32>
    %12 = vector.extract_strided_slice %6 {offsets = [12, 0], sizes = [1, 128], strides = [1, 1]} : vector<24x128xf32> to vector<1x128xf32>
    %13 = vector.extract_strided_slice %6 {offsets = [13, 0], sizes = [1, 128], strides = [1, 1]} : vector<24x128xf32> to vector<1x128xf32>
    %14 = vector.extract_strided_slice %6 {offsets = [14, 0], sizes = [1, 128], strides = [1, 1]} : vector<24x128xf32> to vector<1x128xf32>
    %15 = vector.extract_strided_slice %6 {offsets = [15, 0], sizes = [1, 128], strides = [1, 1]} : vector<24x128xf32> to vector<1x128xf32>
    %16 = vector.extract_strided_slice %6 {offsets = [16, 0], sizes = [1, 128], strides = [1, 1]} : vector<24x128xf32> to vector<1x128xf32>
    %17 = vector.extract_strided_slice %6 {offsets = [17, 0], sizes = [1, 128], strides = [1, 1]} : vector<24x128xf32> to vector<1x128xf32>
    %18 = vector.extract_strided_slice %6 {offsets = [18, 0], sizes = [1, 128], strides = [1, 1]} : vector<24x128xf32> to vector<1x128xf32>
    %19 = vector.extract_strided_slice %6 {offsets = [19, 0], sizes = [1, 128], strides = [1, 1]} : vector<24x128xf32> to vector<1x128xf32>
    %20 = vector.extract_strided_slice %2 {offsets = [0, 0], sizes = [128, 384], strides = [1, 1]} : vector<128x896xbf16> to vector<128x384xbf16>
    %cst = arith.constant dense<0.000000e+00> : vector<32x384xf32>
    %21 = tpu.matmul %1, %20, %cst {dimension_numbers = #tpu.dot_dimension_numbers<[1], [0], [0], [1], [0, 0, 1, 1], [], []>} : vector<32x128xbf16>, vector<128x384xbf16>, vector<32x384xf32> -> vector<32x384xf32>
    %22 = vector.extract_strided_slice %21 {offsets = [0, 0], sizes = [32, 128], strides = [1, 1]} : vector<32x384xf32> to vector<32x128xf32>
    %23 = vector.broadcast %8 : vector<1x128xf32> to vector<32x128xf32>
    %24 = arith.addf %22, %23 : vector<32x128xf32>
    %25 = vector.extract_strided_slice %21 {offsets = [0, 128], sizes = [32, 128], strides = [1, 1]} : vector<32x384xf32> to vector<32x128xf32>
    %26 = vector.broadcast %9 : vector<1x128xf32> to vector<32x128xf32>
    %27 = arith.addf %25, %26 : vector<32x128xf32>
    %28 = vector.extract_strided_slice %21 {offsets = [0, 256], sizes = [32, 128], strides = [1, 1]} : vector<32x384xf32> to vector<32x128xf32>
    %29 = vector.broadcast %10 : vector<1x128xf32> to vector<32x128xf32>
    %30 = arith.addf %28, %29 : vector<32x128xf32>
    %31 = arith.truncf %24 : vector<32x128xf32> to vector<32x128xbf16>
    %32 = arith.truncf %27 : vector<32x128xf32> to vector<32x128xbf16>
    %cst_7 = arith.constant dense<0.000000e+00> : vector<32x32xf32>
    %33 = tpu.matmul %31, %32, %cst_7 {dimension_numbers = #tpu.dot_dimension_numbers<[1], [1], [0], [0], [0, 0, 1, 0], [], []>} : vector<32x128xbf16>, vector<32x128xbf16>, vector<32x32xf32> -> vector<32x32xf32>
    %34 = arith.addf %33, %4 : vector<32x32xf32>
    %cst_8 = arith.constant dense<0xFF800000> : vector<32xf32>
    %35 = vector.multi_reduction <maximumf>, %34, %cst_8 [1] : vector<32x32xf32> to vector<32xf32>
    %36 = vector.shape_cast %35 : vector<32xf32> to vector<32x1xf32>
    %37 = vector.broadcast %36 : vector<32x1xf32> to vector<32x32xf32>
    %38 = arith.subf %34, %37 : vector<32x32xf32>
    %39 = math.exp %38 : vector<32x32xf32>
    %cst_9 = arith.constant dense<0.000000e+00> : vector<32xf32>
    %40 = vector.multi_reduction <add>, %39, %cst_9 [1] : vector<32x32xf32> to vector<32xf32>
    %41 = vector.shape_cast %40 : vector<32xf32> to vector<32x1xf32>
    %42 = tpu.reciprocal %41 {approx = true} : vector<32x1xf32> -> vector<32x1xf32>
    %43 = vector.broadcast %42 : vector<32x1xf32> to vector<32x32xf32>
    %44 = arith.mulf %39, %43 : vector<32x32xf32>
    %45 = arith.truncf %44 : vector<32x32xf32> to vector<32x32xbf16>
    %46 = arith.truncf %30 : vector<32x128xf32> to vector<32x128xbf16>
    %cst_10 = arith.constant dense<0.000000e+00> : vector<32x128xf32>
    %47 = tpu.matmul %45, %46, %cst_10 {dimension_numbers = #tpu.dot_dimension_numbers<[1], [0], [0], [1], [0, 0, 1, 1], [], []>} : vector<32x32xbf16>, vector<32x128xbf16>, vector<32x128xf32> -> vector<32x128xf32>
    %48 = arith.truncf %47 : vector<32x128xf32> to vector<32x128xbf16>
    %49 = vector.extract_strided_slice %2 {offsets = [0, 384], sizes = [128, 128], strides = [1, 1]} : vector<128x896xbf16> to vector<128x128xbf16>
    %cst_11 = arith.constant dense<0.000000e+00> : vector<32x128xf32>
    %50 = tpu.matmul %48, %49, %cst_11 {dimension_numbers = #tpu.dot_dimension_numbers<[1], [0], [0], [1], [0, 0, 1, 1], [], []>} : vector<32x128xbf16>, vector<128x128xbf16>, vector<32x128xf32> -> vector<32x128xf32>
    %51 = vector.broadcast %11 : vector<1x128xf32> to vector<32x128xf32>
    %52 = arith.addf %50, %51 : vector<32x128xf32>
    %53 = arith.addf %0, %52 : vector<32x128xf32>
    %cst_12 = arith.constant dense<0.000000e+00> : vector<32xf32>
    %54 = vector.multi_reduction <add>, %53, %cst_12 [1] : vector<32x128xf32> to vector<32xf32>
    %55 = vector.shape_cast %54 : vector<32xf32> to vector<32x1xf32>
    %cst_13 = arith.constant 3.125000e-02 : f32
    %56 = vector.broadcast %cst_13 : f32 to vector<32x1xf32>
    %57 = arith.mulf %55, %56 : vector<32x1xf32>
    %58 = vector.broadcast %57 : vector<32x1xf32> to vector<32x128xf32>
    %59 = arith.subf %53, %58 : vector<32x128xf32>
    %60 = vector.broadcast %19 : vector<1x128xf32> to vector<32x128xf32>
    %61 = arith.mulf %59, %60 : vector<32x128xf32>
    %62 = arith.mulf %61, %61 : vector<32x128xf32>
    %cst_14 = arith.constant dense<0.000000e+00> : vector<32xf32>
    %63 = vector.multi_reduction <add>, %62, %cst_14 [1] : vector<32x128xf32> to vector<32xf32>
    %64 = vector.shape_cast %63 : vector<32xf32> to vector<32x1xf32>
    %cst_15 = arith.constant 3.125000e-02 : f32
    %65 = vector.broadcast %cst_15 : f32 to vector<32x1xf32>
    %66 = arith.mulf %64, %65 : vector<32x1xf32>
    %cst_16 = arith.constant 9.99999996E-13 : f32
    %67 = vector.broadcast %cst_16 : f32 to vector<32x1xf32>
    %68 = arith.addf %66, %67 : vector<32x1xf32>
    %69 = math.rsqrt %68 : vector<32x1xf32>
    %70 = vector.broadcast %69 : vector<32x1xf32> to vector<32x128xf32>
    %71 = arith.mulf %59, %70 : vector<32x128xf32>
    %72 = vector.broadcast %15 : vector<1x128xf32> to vector<32x128xf32>
    %73 = arith.mulf %71, %72 : vector<32x128xf32>
    %74 = vector.broadcast %16 : vector<1x128xf32> to vector<32x128xf32>
    %75 = arith.addf %73, %74 : vector<32x128xf32>
    %76 = arith.truncf %75 : vector<32x128xf32> to vector<32x128xbf16>
    %77 = vector.extract_strided_slice %2 {offsets = [0, 512], sizes = [128, 128], strides = [1, 1]} : vector<128x896xbf16> to vector<128x128xbf16>
    %cst_17 = arith.constant dense<0.000000e+00> : vector<32x128xf32>
    %78 = tpu.matmul %76, %77, %cst_17 {dimension_numbers = #tpu.dot_dimension_numbers<[1], [0], [0], [1], [0, 0, 1, 1], [], []>} : vector<32x128xbf16>, vector<128x128xbf16>, vector<32x128xf32> -> vector<32x128xf32>
    %79 = vector.broadcast %12 : vector<1x128xf32> to vector<32x128xf32>
    %80 = arith.addf %78, %79 : vector<32x128xf32>
    %81 = arith.mulf %80, %80 : vector<32x128xf32>
    %82 = arith.mulf %80, %81 : vector<32x128xf32>
    %cst_18 = arith.constant 4.471500e-02 : f32
    %83 = vector.broadcast %cst_18 : f32 to vector<32x128xf32>
    %84 = arith.mulf %83, %82 : vector<32x128xf32>
    %85 = arith.addf %80, %84 : vector<32x128xf32>
    %cst_19 = arith.constant 0.797884583 : f32
    %86 = vector.broadcast %cst_19 : f32 to vector<32x128xf32>
    %87 = arith.mulf %86, %85 : vector<32x128xf32>
    %88 = math.tanh %87 : vector<32x128xf32>
    %cst_20 = arith.constant 1.000000e+00 : f32
    %89 = vector.broadcast %cst_20 : f32 to vector<32x128xf32>
    %90 = arith.addf %89, %88 : vector<32x128xf32>
    %cst_21 = arith.constant 5.000000e-01 : f32
    %91 = vector.broadcast %cst_21 : f32 to vector<32x128xf32>
    %92 = arith.mulf %91, %90 : vector<32x128xf32>
    %93 = arith.mulf %80, %92 : vector<32x128xf32>
    %94 = arith.truncf %93 : vector<32x128xf32> to vector<32x128xbf16>
    %95 = vector.extract_strided_slice %2 {offsets = [0, 640], sizes = [128, 128], strides = [1, 1]} : vector<128x896xbf16> to vector<128x128xbf16>
    %cst_22 = arith.constant dense<0.000000e+00> : vector<32x128xf32>
    %96 = tpu.matmul %94, %95, %cst_22 {dimension_numbers = #tpu.dot_dimension_numbers<[1], [0], [0], [1], [0, 0, 1, 1], [], []>} : vector<32x128xbf16>, vector<128x128xbf16>, vector<32x128xf32> -> vector<32x128xf32>
    %97 = vector.broadcast %13 : vector<1x128xf32> to vector<32x128xf32>
    %98 = arith.addf %96, %97 : vector<32x128xf32>
    %99 = arith.addf %75, %98 : vector<32x128xf32>
    %cst_23 = arith.constant dense<0.000000e+00> : vector<32xf32>
    %100 = vector.multi_reduction <add>, %99, %cst_23 [1] : vector<32x128xf32> to vector<32xf32>
    %101 = vector.shape_cast %100 : vector<32xf32> to vector<32x1xf32>
    %cst_24 = arith.constant 3.125000e-02 : f32
    %102 = vector.broadcast %cst_24 : f32 to vector<32x1xf32>
    %103 = arith.mulf %101, %102 : vector<32x1xf32>
    %104 = vector.broadcast %103 : vector<32x1xf32> to vector<32x128xf32>
    %105 = arith.subf %99, %104 : vector<32x128xf32>
    %106 = vector.broadcast %19 : vector<1x128xf32> to vector<32x128xf32>
    %107 = arith.mulf %105, %106 : vector<32x128xf32>
    %108 = arith.mulf %107, %107 : vector<32x128xf32>
    %cst_25 = arith.constant dense<0.000000e+00> : vector<32xf32>
    %109 = vector.multi_reduction <add>, %108, %cst_25 [1] : vector<32x128xf32> to vector<32xf32>
    %110 = vector.shape_cast %109 : vector<32xf32> to vector<32x1xf32>
    %cst_26 = arith.constant 3.125000e-02 : f32
    %111 = vector.broadcast %cst_26 : f32 to vector<32x1xf32>
    %112 = arith.mulf %110, %111 : vector<32x1xf32>
    %cst_27 = arith.constant 9.99999996E-13 : f32
    %113 = vector.broadcast %cst_27 : f32 to vector<32x1xf32>
    %114 = arith.addf %112, %113 : vector<32x1xf32>
    %115 = math.rsqrt %114 : vector<32x1xf32>
    %116 = vector.broadcast %115 : vector<32x1xf32> to vector<32x128xf32>
    %117 = arith.mulf %105, %116 : vector<32x128xf32>
    %118 = vector.broadcast %17 : vector<1x128xf32> to vector<32x128xf32>
    %119 = arith.mulf %117, %118 : vector<32x128xf32>
    %120 = vector.broadcast %18 : vector<1x128xf32> to vector<32x128xf32>
    %121 = arith.addf %119, %120 : vector<32x128xf32>
    %cst_28 = arith.constant dense<0.000000e+00> : vector<8x128xf32>
    %122 = tpu.matmul %5, %121, %cst_28 {dimension_numbers = #tpu.dot_dimension_numbers<[1], [0], [0], [1], [0, 0, 1, 1], [], []>} : vector<8x32xf32>, vector<32x128xf32>, vector<8x128xf32> -> vector<8x128xf32>
    %123 = arith.truncf %122 : vector<8x128xf32> to vector<8x128xbf16>
    %124 = vector.extract_strided_slice %2 {offsets = [0, 768], sizes = [128, 128], strides = [1, 1]} : vector<128x896xbf16> to vector<128x128xbf16>
    %cst_29 = arith.constant dense<0.000000e+00> : vector<8x128xf32>
    %125 = tpu.matmul %123, %124, %cst_29 {dimension_numbers = #tpu.dot_dimension_numbers<[1], [0], [0], [1], [0, 0, 1, 1], [], []>} : vector<8x128xbf16>, vector<128x128xbf16>, vector<8x128xf32> -> vector<8x128xf32>
    %126 = vector.broadcast %14 : vector<1x128xf32> to vector<8x128xf32>
    %127 = arith.addf %125, %126 : vector<8x128xf32>
    %cst_30 = arith.constant dense<0xFF800000> : vector<8xf32>
    %128 = vector.multi_reduction <maximumf>, %127, %cst_30 [1] : vector<8x128xf32> to vector<8xf32>
    %129 = vector.shape_cast %128 : vector<8xf32> to vector<8x1xf32>
    %130 = vector.broadcast %129 : vector<8x1xf32> to vector<8x128xf32>
    %131 = arith.subf %127, %130 : vector<8x128xf32>
    %132 = math.exp %131 : vector<8x128xf32>
    %cst_31 = arith.constant dense<0.000000e+00> : vector<8xf32>
    %133 = vector.multi_reduction <add>, %132, %cst_31 [1] : vector<8x128xf32> to vector<8xf32>
    %134 = vector.shape_cast %133 : vector<8xf32> to vector<8x1xf32>
    %135 = math.log %134 : vector<8x1xf32>
    %136 = arith.addf %129, %135 : vector<8x1xf32>
    %137 = arith.mulf %7, %127 : vector<8x128xf32>
    %cst_32 = arith.constant dense<0.000000e+00> : vector<8xf32>
    %138 = vector.multi_reduction <add>, %137, %cst_32 [1] : vector<8x128xf32> to vector<8xf32>
    %139 = vector.shape_cast %138 : vector<8xf32> to vector<8x1xf32>
    %cst_33 = arith.constant dense<0.000000e+00> : vector<8xf32>
    %140 = vector.multi_reduction <add>, %7, %cst_33 [1] : vector<8x128xf32> to vector<8xf32>
    %141 = vector.shape_cast %140 : vector<8xf32> to vector<8x1xf32>
    %142 = arith.subf %136, %139 : vector<8x1xf32>
    %143 = arith.mulf %142, %141 : vector<8x1xf32>
    %144 = vector.shape_cast %143 : vector<8x1xf32> to vector<1x8x1xf32>
    %cst_34 = arith.constant dense<0.000000e+00> : vector<1xf32>
    %145 = vector.multi_reduction <add>, %144, %cst_34 [1, 2] : vector<1x8x1xf32> to vector<1xf32>
    %146 = vector.shape_cast %145 : vector<1xf32> to vector<1x1x1xf32>
    %147 = vector.extract %146[0, 0, 0] : f32 from vector<1x1x1xf32>
    %cst_35 = arith.constant 0.166666672 : f32
    %148 = arith.mulf %147, %cst_35 : f32
    %149 = tpu.iota {dimensions = array<i32: 0>} : vector<8x128xi32>
    %c7_i32 = arith.constant 7 : i32
    %150 = vector.broadcast %c7_i32 : i32 to vector<8x128xi32>
    %151 = arith.cmpi eq, %149, %150 : vector<8x128xi32>
    %152 = vector.broadcast %148 : f32 to vector<8x128xf32>
    %153 = arith.select %151, %152, %127 : vector<8x128xi1>, vector<8x128xf32>
    %c0_36 = arith.constant 0 : index
    %c0_37 = arith.constant 0 : index
    %154 = vector.load %arg5[%c0_36, %c0_37] : memref<8x128xf32, #tpu.memory_space<vmem>>, vector<8x128xf32>
    tpu.vector_store %arg5[%c0_36, %c0_37], %153 {strides = array<i32>} : memref<8x128xf32, #tpu.memory_space<vmem>>, vector<8x128xf32>,
    return
  }
  func.func @transform_0(%arg0: i32) -> (i32, i32) {
    %c0_i32 = arith.constant 0 : i32
    %c0_i32_0 = arith.constant 0 : i32
    %c0_i32_1 = arith.constant 0 : i32
    return %c0_i32, %c0_i32_0 : i32, i32
  }
  func.func @transform_1(%arg0: i32) -> (i32, i32) {
    %c0_i32 = arith.constant 0 : i32
    %c0_i32_0 = arith.constant 0 : i32
    %c0_i32_1 = arith.constant 0 : i32
    return %c0_i32, %c0_i32_0 : i32, i32
  }
  func.func @transform_2(%arg0: i32) -> (i32, i32) {
    %c0_i32 = arith.constant 0 : i32
    %c0_i32_0 = arith.constant 0 : i32
    %c0_i32_1 = arith.constant 0 : i32
    return %c0_i32, %c0_i32_0 : i32, i32
  }
  func.func @transform_3(%arg0: i32) -> (i32, i32) {
    %c0_i32 = arith.constant 0 : i32
    %c0_i32_0 = arith.constant 0 : i32
    %c0_i32_1 = arith.constant 0 : i32
    return %c0_i32, %c0_i32_0 : i32, i32
  }
  func.func @transform_4(%arg0: i32) -> (i32, i32) {
    %c0_i32 = arith.constant 0 : i32
    %c0_i32_0 = arith.constant 0 : i32
    %c0_i32_1 = arith.constant 0 : i32
    return %c0_i32, %c0_i32_0 : i32, i32
  }
}

</mosaic_0001>

<llo_original>
// kernel: tagger_forward.1
$region0: #{tagger_forward.1}
  #allocation0 [shape = 'u32[]', space=smem, size = 0x4, offset = 0x4, fixed_abs, tag = 'smem constant byte address 0x4 - core index']
  #allocation1 [shape = 'u32[144,128]{1,0:T(1,128)}', space=vmem, size = 0x12000, scoped, tag = 'internal scratch']
  %s0 = inlined_call_operand.vmem [shape: f32[32,128], index: 0, kind: input, shape index: {}]
  %s1 = inlined_call_operand.vmem [shape: bf16[128,896], index: 1, kind: input, shape index: {}]
  %s2 = inlined_call_operand.vmem [shape: f32[48,32], index: 2, kind: input, shape index: {}]
  %s3 = inlined_call_operand.hbm [shape: f32[24,128], index: 3, kind: input, shape index: {}]
  %s4 = inlined_call_operand.vmem [shape: f32[8,128], index: 4, kind: output, shape index: {}]
  %s5 = sld [smem:[#allocation0]]
  $region30: #{tagger_forward.1} parent=0
    _
  %s7 = ssub.s32 1, %s5
  %s8 = scalar_select 0, %s7, %s5
  $region1: #{tagger_forward.1} parent=0
    #allocation2 [shape = 'u8[12288]{0}', space=vmem, size = 0x3000, scoped, tag = 'input window, operand 3, single buffered']
    #allocation3 [shape = 's32[1]{0}', space=sflag, size = 0x4, scoped, tag = 'scoped memory for tagger_forward.1']
    %9 = vsyncpa [#allocation3], 0
    // Predicated region
    $region2: #{tagger_forward.1} parent=1 // pred_check
      _
    $region3: #{tagger_forward.1} parent=1 // pred_check_branch
      %11 = sbr.rel (0) target = $region5
    $region4: #{tagger_forward.1} parent=1 // pred_region
      _
    $region5: #{tagger_forward.1} parent=1 // pred_fallthru
      _
    // Predicated region
    $region6: #{tagger_forward.1} parent=1 // pred_check
      _
    $region7: #{tagger_forward.1} parent=1 // pred_check_branch
      %13 = sbr.rel (0) target = $region9
    $region8: #{tagger_forward.1} parent=1 // pred_region
      _
    $region9: #{tagger_forward.1} parent=1 // pred_fallthru
      _
    // Predicated region
    $region10: #{tagger_forward.1} parent=1 // pred_check
      _
    $region11: #{tagger_forward.1} parent=1 // pred_check_branch
      %15 = sbr.rel (0) target = $region13
    $region12: #{tagger_forward.1} parent=1 // pred_region
      _
    $region13: #{tagger_forward.1} parent=1 // pred_fallthru
      _
    // Predicated region
    $region14: #{tagger_forward.1} parent=1 // pred_check
      _
    $region15: #{tagger_forward.1} parent=1 // pred_check_branch
      %17 = sbr.rel (0) target = $region17
    $region16: #{tagger_forward.1} parent=1 // pred_region
      %s19 = ssub.s32 384, 384
      %20 = vsyncadd [#allocation3], %s19
      %s21 = sshll.u32 [#allocation2], 4
      %s22 = int_to_ptr.vmem [resolvable:$true] %s21
      %27 = dma.hbm_to_vmem [thread:$0]  %s3, 384, %s22, [#allocation3], 128, 128, 8
    $region17: #{tagger_forward.1} parent=1 // pred_fallthru
      _
    // Predicated region
    $region18: #{tagger_forward.1} parent=1 // pred_check
      _
    $region19: #{tagger_forward.1} parent=1 // pred_check_branch
      %29 = sbr.rel (0) target = $region21
    $region20: #{tagger_forward.1} parent=1 // pred_region
      %30 = dma.done [#allocation3], 384
    $region21: #{tagger_forward.1} parent=1 // pred_fallthru
      _
    %v32 = vld [vmem:[%s0] sm:$0xff]
    %v33 = vld [vmem:[%s0 + $0x8] sm:$0xff]
    %v34 = vld [vmem:[%s0 + $0x10] sm:$0xff]
    %v35 = vld [vmem:[%s0 + $0x18] sm:$0xff]
    %v36 = vpack.c.bf16 %v33, %v32
    %v37 = vpack.c.bf16 %v35, %v34
    %v38 = vld [vmem:[%s1] sm:$0xff]
    %v39 = vld [vmem:[%s1 + $0x8] sm:$0xff]
    %v40 = vld [vmem:[%s1 + $0x10] sm:$0xff]
    %v41 = vld [vmem:[%s1 + $0x18] sm:$0xf]
    %v42 = vld [vmem:[%s1 + $0x1c] sm:$0xff]
    %v43 = vld [vmem:[%s1 + $0x24] sm:$0xff]
    %v44 = vld [vmem:[%s1 + $0x2c] sm:$0xff]
    %v45 = vld [vmem:[%s1 + $0x34] sm:$0xf]
    %v46 = vld [vmem:[%s1 + $0x38] sm:$0xff]
    %v47 = vld [vmem:[%s1 + $0x40] sm:$0xff]
    %v48 = vld [vmem:[%s1 + $0x48] sm:$0xff]
    %v49 = vld [vmem:[%s1 + $0x50] sm:$0xf]
    %v50 = vld [vmem:[%s1 + $0x54] sm:$0xff]
    %v51 = vld [vmem:[%s1 + $0x5c] sm:$0xff]
    %v52 = vld [vmem:[%s1 + $0x64] sm:$0xff]
    %v53 = vld [vmem:[%s1 + $0x6c] sm:$0xf]
    %v54 = vld [vmem:[%s1 + $0x70] sm:$0xff]
    %v55 = vld [vmem:[%s1 + $0x78] sm:$0xff]
    %v56 = vld [vmem:[%s1 + $0x80] sm:$0xff]
    %v57 = vld [vmem:[%s1 + $0x88] sm:$0xf]
    %v58 = vld [vmem:[%s1 + $0x8c] sm:$0xff]
    %v59 = vld [vmem:[%s1 + $0x94] sm:$0xff]
    %v60 = vld [vmem:[%s1 + $0x9c] sm:$0xff]
    %v61 = vld [vmem:[%s1 + $0xa4] sm:$0xf]
    %v62 = vld [vmem:[%s1 + $0xa8] sm:$0xff]
    %v63 = vld [vmem:[%s1 + $0xb0] sm:$0xff]
    %v64 = vld [vmem:[%s1 + $0xb8] sm:$0xff]
    %v65 = vld [vmem:[%s1 + $0xc0] sm:$0xf]
    %v66 = vld [vmem:[%s1 + $0xc4] sm:$0xff]
    %v67 = vld [vmem:[%s1 + $0xcc] sm:$0xff]
    %v68 = vld [vmem:[%s1 + $0xd4] sm:$0xff]
    %v69 = vld [vmem:[%s1 + $0xdc] sm:$0xf]
    %v70 = vld [vmem:[%s1 + $0xe0] sm:$0xff]
    %v71 = vld [vmem:[%s1 + $0xe8] sm:$0xff]
    %v72 = vld [vmem:[%s1 + $0xf0] sm:$0xff]
    %v73 = vld [vmem:[%s1 + $0xf8] sm:$0xf]
    %v74 = vld [vmem:[%s1 + $0xfc] sm:$0xff]
    %v75 = vld [vmem:[%s1 + $0x104] sm:$0xff]
    %v76 = vld [vmem:[%s1 + $0x10c] sm:$0xff]
    %v77 = vld [vmem:[%s1 + $0x114] sm:$0xf]
    %v78 = vld [vmem:[%s1 + $0x118] sm:$0xff]
    %v79 = vld [vmem:[%s1 + $0x120] sm:$0xff]
    %v80 = vld [vmem:[%s1 + $0x128] sm:$0xff]
    %v81 = vld [vmem:[%s1 + $0x130] sm:$0xf]
    %v82 = vld [vmem:[%s1 + $0x134] sm:$0xff]
    %v83 = vld [vmem:[%s1 + $0x13c] sm:$0xff]
    %v84 = vld [vmem:[%s1 + $0x144] sm:$0xff]
    %v85 = vld [vmem:[%s1 + $0x14c] sm:$0xf]
    %v86 = vld [vmem:[%s1 + $0x150] sm:$0xff]
    %v87 = vld [vmem:[%s1 + $0x158] sm:$0xff]
    %v88 = vld [vmem:[%s1 + $0x160] sm:$0xff]
    %v89 = vld [vmem:[%s1 + $0x168] sm:$0xf]
    %v90 = vld [vmem:[%s1 + $0x16c] sm:$0xff]
    %v91 = vld [vmem:[%s1 + $0x174] sm:$0xff]
    %v92 = vld [vmem:[%s1 + $0x17c] sm:$0xff]
    %v93 = vld [vmem:[%s1 + $0x184] sm:$0xf]
    %v94 = vld [vmem:[%s1 + $0x188] sm:$0xff]
    %v95 = vld [vmem:[%s1 + $0x190] sm:$0xff]
    %v96 = vld [vmem:[%s1 + $0x198] sm:$0xff]
    %v97 = vld [vmem:[%s1 + $0x1a0] sm:$0xf]
    %v98 = vld [vmem:[%s1 + $0x1a4] sm:$0xff]
    %v99 = vld [vmem:[%s1 + $0x1ac] sm:$0xff]
    %v100 = vld [vmem:[%s1 + $0x1b4] sm:$0xff]
    %v101 = vld [vmem:[%s1 + $0x1bc] sm:$0xf]
    %v102 = vld [vmem:[%s2] sm:$0xff]
    %v103 = vld [vmem:[%s2 + $0x8] sm:$0xff]
    %v104 = vld [vmem:[%s2 + $0x10] sm:$0xff]
    %v105 = vld [vmem:[%s2 + $0x18] sm:$0xff]
    %v106 = vld [vmem:[%s2 + $0x20] sm:$0xff]
    %v107 = vld [vmem:[#allocation2] sm:$0xff]
    %v108 = vld [vmem:[#allocation2 + $0x8] sm:$0xff]
    %v109 = vld [vmem:[#allocation2 + $0x10] sm:$0xff]
    %v142 = vunpack.c.l.b16 %v38
    %v143 = vunpack.c.h.b16 %v38
    %v144 = vunpack.c.l.b16 %v39
    %v145 = vunpack.c.l.b16 %v42
    %v146 = vunpack.c.h.b16 %v42
    %v147 = vunpack.c.l.b16 %v43
    %v148 = vunpack.c.l.b16 %v46
    %v149 = vunpack.c.h.b16 %v46
    %v150 = vunpack.c.l.b16 %v47
    %v151 = vunpack.c.l.b16 %v50
    %v152 = vunpack.c.h.b16 %v50
    %v153 = vunpack.c.l.b16 %v51
    %v154 = vunpack.c.l.b16 %v54
    %v155 = vunpack.c.h.b16 %v54
    %v156 = vunpack.c.l.b16 %v55
    %v157 = vunpack.c.l.b16 %v58
    %v158 = vunpack.c.h.b16 %v58
    %v159 = vunpack.c.l.b16 %v59
    %v160 = vunpack.c.l.b16 %v62
    %v161 = vunpack.c.h.b16 %v62
    %v162 = vunpack.c.l.b16 %v63
    %v163 = vunpack.c.l.b16 %v66
    %v164 = vunpack.c.h.b16 %v66
    %v165 = vunpack.c.l.b16 %v67
    %v166 = vunpack.c.l.b16 %v70
    %v167 = vunpack.c.h.b16 %v70
    %v168 = vunpack.c.l.b16 %v71
    %v169 = vunpack.c.l.b16 %v74
    %v170 = vunpack.c.h.b16 %v74
    %v171 = vunpack.c.l.b16 %v75
    %v172 = vunpack.c.l.b16 %v78
    %v173 = vunpack.c.h.b16 %v78
    %v174 = vunpack.c.l.b16 %v79
    %v175 = vunpack.c.l.b16 %v82
    %v176 = vunpack.c.h.b16 %v82
    %v177 = vunpack.c.l.b16 %v83
    %v178 = vunpack.c.l.b16 %v86
    %v179 = vunpack.c.h.b16 %v86
    %v180 = vunpack.c.l.b16 %v87
    %v181 = vunpack.c.l.b16 %v90
    %v182 = vunpack.c.h.b16 %v90
    %v183 = vunpack.c.l.b16 %v91
    %v184 = vunpack.c.l.b16 %v94
    %v185 = vunpack.c.h.b16 %v94
    %v186 = vunpack.c.l.b16 %v95
    %v187 = vunpack.c.l.b16 %v98
    %v188 = vunpack.c.h.b16 %v98
    %v189 = vunpack.c.l.b16 %v99
    %v190 = vpack.c.b16 %v145, %v142
    %v191 = vpack.c.b16 %v146, %v143
    %v192 = vpack.c.b16 %v147, %v144
    %v193 = vpack.c.b16 %v151, %v148
    %v194 = vpack.c.b16 %v152, %v149
    %v195 = vpack.c.b16 %v153, %v150
    %v196 = vpack.c.b16 %v157, %v154
    %v197 = vpack.c.b16 %v158, %v155
    %v198 = vpack.c.b16 %v159, %v156
    %v199 = vpack.c.b16 %v163, %v160
    %v200 = vpack.c.b16 %v164, %v161
    %v201 = vpack.c.b16 %v165, %v162
    %v202 = vpack.c.b16 %v169, %v166
    %v203 = vpack.c.b16 %v170, %v167
    %v204 = vpack.c.b16 %v171, %v168
    %v205 = vpack.c.b16 %v175, %v172
    %v206 = vpack.c.b16 %v176, %v173
    %v207 = vpack.c.b16 %v177, %v174
    %v208 = vpack.c.b16 %v181, %v178
    %v209 = vpack.c.b16 %v182, %v179
    %v210 = vpack.c.b16 %v183, %v180
    %v211 = vpack.c.b16 %v187, %v184
    %v212 = vpack.c.b16 %v188, %v185
    %v213 = vpack.c.b16 %v189, %v186
    %238 = vmatprep.subr.bf16.mxu0 %v191
    %239 = vmatpush1.bf16.msra.mxu0 %v190
    %240 = vmatprep.subr.bf16.mxu0 %v194
    %241 = vmatpush1.bf16.msra.mxu0 %v193
    %242 = vmatprep.subr.bf16.mxu0 %v197
    %243 = vmatpush1.bf16.msra.mxu0 %v196
    %244 = vmatprep.subr.bf16.mxu0 %v200
    %245 = vmatpush1.bf16.msra.mxu0 %v199
    %246 = vmatprep.subr.bf16.mxu0 %v203
    %247 = vmatpush1.bf16.msra.mxu0 %v202
    %248 = vmatprep.subr.bf16.mxu0 %v206
    %249 = vmatpush1.bf16.msra.mxu0 %v205
    %250 = vmatprep.subr.bf16.mxu0 %v209
    %251 = vmatpush1.bf16.msra.mxu0 %v208
    %252 = vmatprep.subr.bf16.mxu0 %v212
    %253 = vmatpush1.bf16.msra.mxu0 %v211
    %254 = vmatprep.subr.bf16.mxu0 0
    %255 = vmatpush1.bf16.msra.mxu0 0
    %256 = vmatprep.subr.bf16.mxu0 0
    %257 = vmatpush1.bf16.msra.mxu0 0
    %258 = vmatprep.subr.bf16.mxu0 0
    %259 = vmatpush1.bf16.msra.mxu0 0
    %260 = vmatprep.subr.bf16.mxu0 0
    %261 = vmatpush1.bf16.msra.mxu0 0
    %262 = vmatprep.subr.bf16.mxu0 0
    %263 = vmatpush1.bf16.msra.mxu0 0
    %264 = vmatprep.subr.bf16.mxu0 0
    %265 = vmatpush1.bf16.msra.mxu0 0
    %266 = vmatprep.subr.bf16.mxu0 0
    %267 = vmatpush1.bf16.msra.mxu0 0
    %268 = vmatprep.subr.bf16.mxu0 0
    %269 = vmatpush1.bf16.msra.mxu0 0
    %270 = vmatprep.mubr.bf16.mxu0 0
    %271 = vmatmul.mubr.bf16.gmra.mrb[0].mxu0 %v36
    %v272 = vpop.f32.mrb[0].mxu0
    %v273 = vadd.f32 0.0, %v272
    %v274 = vpop.f32.mrb[0].mxu0
    %v275 = vadd.f32 0.0, %v274
    %v276 = vpop.f32.mrb[0].mxu0
    %v277 = vadd.f32 0.0, %v276
    %v278 = vpop.f32.mrb[0].mxu0
    %v279 = vadd.f32 0.0, %v278
    %280 = vmatprep.mubr.bf16.mxu0 0
    %281 = vmatmul.mubr.bf16.gmra.mrb[0].mxu0 %v37
    %v282 = vpop.f32.mrb[0].mxu0
    %v283 = vadd.f32 0.0, %v282
    %v284 = vpop.f32.mrb[0].mxu0
    %v285 = vadd.f32 0.0, %v284
    %v286 = vpop.f32.mrb[0].mxu0
    %v287 = vadd.f32 0.0, %v286
    %v288 = vpop.f32.mrb[0].mxu0
    %v289 = vadd.f32 0.0, %v288
    %290 = vdwg.mxu0
    %291 = vmatprep.subr.bf16.mxu0 0
    %292 = vmatpush1.bf16.msra.mxu0 %v192
    %293 = vmatprep.subr.bf16.mxu0 0
    %294 = vmatpush1.bf16.msra.mxu0 %v195
    %295 = vmatprep.subr.bf16.mxu0 0
    %296 = vmatpush1.bf16.msra.mxu0 %v198
    %297 = vmatprep.subr.bf16.mxu0 0
    %298 = vmatpush1.bf16.msra.mxu0 %v201
    %299 = vmatprep.subr.bf16.mxu0 0
    %300 = vmatpush1.bf16.msra.mxu0 %v204
    %301 = vmatprep.subr.bf16.mxu0 0
    %302 = vmatpush1.bf16.msra.mxu0 %v207
    %303 = vmatprep.subr.bf16.mxu0 0
    %304 = vmatpush1.bf16.msra.mxu0 %v210
    %305 = vmatprep.subr.bf16.mxu0 0
    %306 = vmatpush1.bf16.msra.mxu0 %v213
    %307 = vmatprep.subr.bf16.mxu0 0
    %308 = vmatpush1.bf16.msra.mxu0 0
    %309 = vmatprep.subr.bf16.mxu0 0
    %310 = vmatpush1.bf16.msra.mxu0 0
    %311 = vmatprep.subr.bf16.mxu0 0
    %312 = vmatpush1.bf16.msra.mxu0 0
    %313 = vmatprep.subr.bf16.mxu0 0
    %314 = vmatpush1.bf16.msra.mxu0 0
    %315 = vmatprep.subr.bf16.mxu0 0
    %316 = vmatpush1.bf16.msra.mxu0 0
    %317 = vmatprep.subr.bf16.mxu0 0
    %318 = vmatpush1.bf16.msra.mxu0 0
    %319 = vmatprep.subr.bf16.mxu0 0
    %320 = vmatpush1.bf16.msra.mxu0 0
    %321 = vmatprep.subr.bf16.mxu0 0
    %322 = vmatpush1.bf16.msra.mxu0 0
    %323 = vmatprep.mubr.bf16.mxu0 0
    %324 = vmatmul.mubr.bf16.gmra.mrb[0].mxu0 %v36
    %v325 = vpop.f32.mrb[0].mxu0
    %v326 = vadd.f32 0.0, %v325
    %v327 = vpop.f32.mrb[0].mxu0
    %v328 = vpop.f32.mrb[0].mxu0
    %v329 = vadd.f32 0.0, %v328
    %v330 = vpop.f32.mrb[0].mxu0
    %331 = vmatprep.mubr.bf16.mxu0 0
    %332 = vmatmul.mubr.bf16.gmra.mrb[0].mxu0 %v37
    %v333 = vpop.f32.mrb[0].mxu0
    %v334 = vadd.f32 0.0, %v333
    %v335 = vpop.f32.mrb[0].mxu0
    %v336 = vpop.f32.mrb[0].mxu0
    %v337 = vadd.f32 0.0, %v336
    %v338 = vpop.f32.mrb[0].mxu0
    %339 = vdwg.mxu0
    %v340 = vlaneseq
    %v341 = vshrl.u32 %v340, 7
    %v342 = vsub.s32 0, %v341
    %v343 = vrot.slane %v108, %v342
    %v344 = vadd.f32 %v273, %v343
    %v345 = vadd.f32 %v277, %v343
    %v346 = vadd.f32 %v283, %v343
    %v347 = vadd.f32 %v287, %v343
    %v348 = vlaneseq
    %v349 = vshrl.u32 %v348, 7
    %v350 = vsub.s32 1, %v349
    %v351 = vrot.slane %v108, %v350
    %v352 = vadd.f32 %v275, %v351
    %v353 = vadd.f32 %v279, %v351
    %v354 = vadd.f32 %v285, %v351
    %v355 = vadd.f32 %v289, %v351
    %v356 = vlaneseq
    %v357 = vshrl.u32 %v356, 7
    %v358 = vsub.s32 2, %v357
    %v359 = vrot.slane %v108, %v358
    %v360 = vadd.f32 %v326, %v359
    %v361 = vadd.f32 %v329, %v359
    %v362 = vadd.f32 %v334, %v359
    %v363 = vadd.f32 %v337, %v359
    %v364 = vpack.c.bf16 %v345, %v344
    %v365 = vpack.c.bf16 %v347, %v346
    %v366 = vpack.c.bf16 %v353, %v352
    %v367 = vpack.c.bf16 %v355, %v354
    %368 = vmatprep.subr.bf16.mxu0 0
    %369 = vmatpush1.bf16.xpose.msra.mxu0 %v366
    %370 = vmatprep.subr.bf16.mxu0 0
    %371 = vmatpush1.bf16.xpose.msra.mxu0 %v367
    %372 = vmatprep.subr.bf16.mxu0 0
    %373 = vmatpush1.bf16.xpose.msra.mxu0 0
    %374 = vmatprep.subr.bf16.mxu0 0
    %375 = vmatpush1.bf16.xpose.msra.mxu0 0
    %376 = vmatprep.subr.bf16.mxu0 0
    %377 = vmatpush1.bf16.xpose.msra.mxu0 0
    %378 = vmatprep.subr.bf16.mxu0 0
    %379 = vmatpush1.bf16.xpose.msra.mxu0 0
    %380 = vmatprep.subr.bf16.mxu0 0
    %381 = vmatpush1.bf16.xpose.msra.mxu0 0
    %382 = vmatprep.subr.bf16.mxu0 0
    %383 = vmatpush1.bf16.xpose.msra.mxu0 0
    %384 = vmatprep.subr.bf16.mxu0 0
    %385 = vmatpush1.bf16.xpose.msra.mxu0 0
    %386 = vmatprep.subr.bf16.mxu0 0
    %387 = vmatpush1.bf16.xpose.msra.mxu0 0
    %388 = vmatprep.subr.bf16.mxu0 0
    %389 = vmatpush1.bf16.xpose.msra.mxu0 0
    %390 = vmatprep.subr.bf16.mxu0 0
    %391 = vmatpush1.bf16.xpose.msra.mxu0 0
    %392 = vmatprep.subr.bf16.mxu0 0
    %393 = vmatpush1.bf16.xpose.msra.mxu0 0
    %394 = vmatprep.subr.bf16.mxu0 0
    %395 = vmatpush1.bf16.xpose.msra.mxu0 0
    %396 = vmatprep.subr.bf16.mxu0 0
    %397 = vmatpush1.bf16.xpose.msra.mxu0 0
    %398 = vmatprep.subr.bf16.mxu0 0
    %399 = vmatpush1.bf16.xpose.msra.mxu0 0
    %400 = vmatprep.mubr.bf16.mxu0 0
    %401 = vmatmul.mubr.bf16.gmra.mrb[0].mxu0 %v364
    %v402 = vpop.f32.mrb[0].mxu0
    %v403 = vadd.f32 %v102, %v402
    %v404 = vpop.f32.mrb[0].mxu0
    %v405 = vpop.f32.mrb[0].mxu0
    %v406 = vadd.f32 %v103, %v405
    %v407 = vpop.f32.mrb[0].mxu0
    %408 = vmatprep.mubr.bf16.mxu0 0
    %409 = vmatmul.mubr.bf16.gmra.mrb[0].mxu0 %v365
    %v410 = vpop.f32.mrb[0].mxu0
    %v411 = vadd.f32 %v104, %v410
    %v412 = vpop.f32.mrb[0].mxu0
    %v413 = vpop.f32.mrb[0].mxu0
    %v414 = vadd.f32 %v105, %v413
    %v415 = vpop.f32.mrb[0].mxu0
    %416 = vdwg.mxu0
    %vm417 = vcmask 261120
    %v418 = vsel %vm417, %v403, -inf
    %419 = vmax.xlane.f32.xlu0 %v418
    %v420 = vpop.xlane.xlu0 %419
    %v421 = vsel %vm417, %v406, -inf
    %422 = vmax.xlane.f32.xlu0 %v421
    %v423 = vpop.xlane.xlu0 %422
    %v424 = vsel %vm417, %v411, -inf
    %425 = vmax.xlane.f32.xlu0 %v424
    %v426 = vpop.xlane.xlu0 %425
    %v427 = vsel %vm417, %v414, -inf
    %428 = vmax.xlane.f32.xlu0 %v427
    %v429 = vpop.xlane.xlu0 %428
    %v430 = vsub.f32 %v403, %v420
    %v431 = vsub.f32 %v406, %v423
    %v432 = vsub.f32 %v411, %v426
    %v433 = vsub.f32 %v414, %v429
    %v434 = vmul.f32 %v430, 1.442695
    %v435 = vpow.pop %v434
    %v436 = vmul.f32 %v431, 1.442695
    %v437 = vpow.pop %v436
    %v438 = vmul.f32 %v432, 1.442695
    %v439 = vpow.pop %v438
    %v440 = vmul.f32 %v433, 1.442695
    %v441 = vpow.pop %v440
    %v442 = vsel %vm417, %v435, 0.0
    %443 = vadd.xlane.f32.xlu0 %v442
    %v444 = vpop.xlane.xlu0 %443
    %v445 = vsel %vm417, %v437, 0.0
    %446 = vadd.xlane.f32.xlu0 %v445
    %v447 = vpop.xlane.xlu0 %446
    %v448 = vsel %vm417, %v439, 0.0
    %449 = vadd.xlane.f32.xlu0 %v448
    %v450 = vpop.xlane.xlu0 %449
    %v451 = vsel %vm417, %v441, 0.0
    %452 = vadd.xlane.f32.xlu0 %v451
    %v453 = vpop.xlane.xlu0 %452
    %v454 = vrcp.pop %v444
    %v455 = vrcp.pop %v447
    %v456 = vrcp.pop %v450
    %v457 = vrcp.pop %v453
    %v458 = vmul.f32 %v435, %v454
    %v459 = vmul.f32 %v437, %v455
    %v460 = vmul.f32 %v439, %v456
    %v461 = vmul.f32 %v441, %v457
    %v462 = vpack.c.bf16 %v459, %v458
    %v463 = vpack.c.bf16 %v461, %v460
    %v464 = vpack.c.bf16 %v361, %v360
    %v465 = vpack.c.bf16 %v363, %v362
    %v467 = vsel %vm417, %v462, 0
    %v470 = vsel %vm417, %v463, 0
    %472 = vmatprep.subr.bf16.mxu0 0
    %473 = vmatpush1.bf16.msra.mxu0 %v464
    %474 = vmatprep.subr.bf16.mxu0 0
    %475 = vmatpush1.bf16.msra.mxu0 %v465
    %476 = vmatprep.subr.bf16.mxu0 0
    %477 = vmatpush1.bf16.msra.mxu0 0
    %478 = vmatprep.subr.bf16.mxu0 0
    %479 = vmatpush1.bf16.msra.mxu0 0
    %480 = vmatprep.subr.bf16.mxu0 0
    %481 = vmatpush1.bf16.msra.mxu0 0
    %482 = vmatprep.subr.bf16.mxu0 0
    %483 = vmatpush1.bf16.msra.mxu0 0
    %484 = vmatprep.subr.bf16.mxu0 0
    %485 = vmatpush1.bf16.msra.mxu0 0
    %486 = vmatprep.subr.bf16.mxu0 0
    %487 = vmatpush1.bf16.msra.mxu0 0
    %488 = vmatprep.subr.bf16.mxu0 0
    %489 = vmatpush1.bf16.msra.mxu0 0
    %490 = vmatprep.subr.bf16.mxu0 0
    %491 = vmatpush1.bf16.msra.mxu0 0
    %492 = vmatprep.subr.bf16.mxu0 0
    %493 = vmatpush1.bf16.msra.mxu0 0
    %494 = vmatprep.subr.bf16.mxu0 0
    %495 = vmatpush1.bf16.msra.mxu0 0
    %496 = vmatprep.subr.bf16.mxu0 0
    %497 = vmatpush1.bf16.msra.mxu0 0
    %498 = vmatprep.subr.bf16.mxu0 0
    %499 = vmatpush1.bf16.msra.mxu0 0
    %500 = vmatprep.subr.bf16.mxu0 0
    %501 = vmatpush1.bf16.msra.mxu0 0
    %502 = vmatprep.subr.bf16.mxu0 0
    %503 = vmatpush1.bf16.msra.mxu0 0
    %504 = vmatprep.mubr.bf16.mxu0 0
    %505 = vmatmul.mubr.bf16.gmra.mrb[0].mxu0 %v467
    %v506 = vpop.f32.mrb[0].mxu0
    %v507 = vadd.f32 0.0, %v506
    %v508 = vpop.f32.mrb[0].mxu0
    %v509 = vpop.f32.mrb[0].mxu0
    %v510 = vadd.f32 0.0, %v509
    %v511 = vpop.f32.mrb[0].mxu0
    %512 = vmatprep.mubr.bf16.mxu0 0
    %513 = vmatmul.mubr.bf16.gmra.mrb[0].mxu0 %v470
    %v514 = vpop.f32.mrb[0].mxu0
    %v515 = vadd.f32 0.0, %v514
    %v516 = vpop.f32.mrb[0].mxu0
    %v517 = vpop.f32.mrb[0].mxu0
    %v518 = vadd.f32 0.0, %v517
    %v519 = vpop.f32.mrb[0].mxu0
    %520 = vdwg.mxu0
    %v521 = vpack.c.bf16 %v510, %v507
    %v522 = vpack.c.bf16 %v518, %v515
    %v523 = vlaneseq
    %v524 = vshrl.u32 %v523, 7
    %v525 = vsub.s32 3, %v524
    %v526 = vrot.slane %v108, %v525
    %v527 = vunpack.c.h.b16 %v39
    %v528 = vunpack.c.h.b16 %v43
    %v529 = vunpack.c.h.b16 %v47
    %v530 = vunpack.c.h.b16 %v51
    %v531 = vunpack.c.h.b16 %v55
    %v532 = vunpack.c.h.b16 %v59
    %v533 = vunpack.c.h.b16 %v63
    %v534 = vunpack.c.h.b16 %v67
    %v535 = vunpack.c.h.b16 %v71
    %v536 = vunpack.c.h.b16 %v75
    %v537 = vunpack.c.h.b16 %v79
    %v538 = vunpack.c.h.b16 %v83
    %v539 = vunpack.c.h.b16 %v87
    %v540 = vunpack.c.h.b16 %v91
    %v541 = vunpack.c.h.b16 %v95
    %v542 = vunpack.c.h.b16 %v99
    %v543 = vpack.c.b16 %v528, %v527
    %v544 = vpack.c.b16 %v530, %v529
    %v545 = vpack.c.b16 %v532, %v531
    %v546 = vpack.c.b16 %v534, %v533
    %v547 = vpack.c.b16 %v536, %v535
    %v548 = vpack.c.b16 %v538, %v537
    %v549 = vpack.c.b16 %v540, %v539
    %v550 = vpack.c.b16 %v542, %v541
    %559 = vmatprep.subr.bf16.mxu0 0
    %560 = vmatpush1.bf16.msra.mxu0 %v543
    %561 = vmatprep.subr.bf16.mxu0 0
    %562 = vmatpush1.bf16.msra.mxu0 %v544
    %563 = vmatprep.subr.bf16.mxu0 0
    %564 = vmatpush1.bf16.msra.mxu0 %v545
    %565 = vmatprep.subr.bf16.mxu0 0
    %566 = vmatpush1.bf16.msra.mxu0 %v546
    %567 = vmatprep.subr.bf16.mxu0 0
    %568 = vmatpush1.bf16.msra.mxu0 %v547
    %569 = vmatprep.subr.bf16.mxu0 0
    %570 = vmatpush1.bf16.msra.mxu0 %v548
    %571 = vmatprep.subr.bf16.mxu0 0
    %572 = vmatpush1.bf16.msra.mxu0 %v549
    %573 = vmatprep.subr.bf16.mxu0 0
    %574 = vmatpush1.bf16.msra.mxu0 %v550
    %575 = vmatprep.subr.bf16.mxu0 0
    %576 = vmatpush1.bf16.msra.mxu0 0
    %577 = vmatprep.subr.bf16.mxu0 0
    %578 = vmatpush1.bf16.msra.mxu0 0
    %579 = vmatprep.subr.bf16.mxu0 0
    %580 = vmatpush1.bf16.msra.mxu0 0
    %581 = vmatprep.subr.bf16.mxu0 0
    %582 = vmatpush1.bf16.msra.mxu0 0
    %583 = vmatprep.subr.bf16.mxu0 0
    %584 = vmatpush1.bf16.msra.mxu0 0
    %585 = vmatprep.subr.bf16.mxu0 0
    %586 = vmatpush1.bf16.msra.mxu0 0
    %587 = vmatprep.subr.bf16.mxu0 0
    %588 = vmatpush1.bf16.msra.mxu0 0
    %589 = vmatprep.subr.bf16.mxu0 0
    %590 = vmatpush1.bf16.msra.mxu0 0
    %591 = vmatprep.mubr.bf16.mxu0 0
    %592 = vmatmul.mubr.bf16.gmra.mrb[0].mxu0 %v521
    %v593 = vpop.f32.mrb[0].mxu0
    %v594 = vadd.f32 %v526, %v593
    %v595 = vpop.f32.mrb[0].mxu0
    %v596 = vpop.f32.mrb[0].mxu0
    %v597 = vadd.f32 %v526, %v596
    %v598 = vpop.f32.mrb[0].mxu0
    %599 = vmatprep.mubr.bf16.mxu0 0
    %600 = vmatmul.mubr.bf16.gmra.mrb[0].mxu0 %v522
    %v601 = vpop.f32.mrb[0].mxu0
    %v602 = vadd.f32 %v526, %v601
    %v603 = vpop.f32.mrb[0].mxu0
    %v604 = vpop.f32.mrb[0].mxu0
    %v605 = vadd.f32 %v526, %v604
    %v606 = vpop.f32.mrb[0].mxu0
    %607 = vdwg.mxu0
    %v608 = vadd.f32 %v32, %v594
    %v609 = vadd.f32 %v33, %v597
    %v610 = vadd.f32 %v34, %v602
    %v611 = vadd.f32 %v35, %v605
    %612 = vadd.xlane.f32.xlu0 %v608
    %v613 = vpop.xlane.xlu0 %612
    %614 = vadd.xlane.f32.xlu0 %v609
    %v615 = vpop.xlane.xlu0 %614
    %616 = vadd.xlane.f32.xlu0 %v610
    %v617 = vpop.xlane.xlu0 %616
    %618 = vadd.xlane.f32.xlu0 %v611
    %v619 = vpop.xlane.xlu0 %618
    %v620 = vmul.f32 %v613, 0.03125
    %v621 = vmul.f32 %v615, 0.03125
    %v622 = vmul.f32 %v617, 0.03125
    %v623 = vmul.f32 %v619, 0.03125
    %v624 = vsub.f32 %v608, %v620
    %v625 = vsub.f32 %v609, %v621
    %v626 = vsub.f32 %v610, %v622
    %v627 = vsub.f32 %v611, %v623
    %v628 = vlaneseq
    %v629 = vshrl.u32 %v628, 7
    %v630 = vsub.s32 3, %v629
    %v631 = vrot.slane %v109, %v630
    %v632 = vmul.f32 %v624, %v631
    %v633 = vmul.f32 %v625, %v631
    %v634 = vmul.f32 %v626, %v631
    %v635 = vmul.f32 %v627, %v631
    %v636 = vmul.f32 %v632, %v632
    %v637 = vmul.f32 %v633, %v633
    %v638 = vmul.f32 %v634, %v634
    %v639 = vmul.f32 %v635, %v635
    %640 = vadd.xlane.f32.xlu0 %v636
    %v641 = vpop.xlane.xlu0 %640
    %642 = vadd.xlane.f32.xlu0 %v637
    %v643 = vpop.xlane.xlu0 %642
    %644 = vadd.xlane.f32.xlu0 %v638
    %v645 = vpop.xlane.xlu0 %644
    %646 = vadd.xlane.f32.xlu0 %v639
    %v647 = vpop.xlane.xlu0 %646
    %v648 = vmul.f32 %v641, 0.03125
    %v649 = vmul.f32 %v643, 0.03125
    %v650 = vmul.f32 %v645, 0.03125
    %v651 = vmul.f32 %v647, 0.03125
    %v652 = vadd.f32 %v648, 1e-12
    %v653 = vadd.f32 %v649, 1e-12
    %v654 = vadd.f32 %v650, 1e-12
    %v655 = vadd.f32 %v651, 1e-12
    %v656 = vrsqrt.pop %v652
    %v657 = vrsqrt.pop %v653
    %v658 = vrsqrt.pop %v654
    %v659 = vrsqrt.pop %v655
    %v660 = vmul.f32 %v624, %v656
    %v661 = vmul.f32 %v625, %v657
    %v662 = vmul.f32 %v626, %v658
    %v663 = vmul.f32 %v627, %v659
    %v664 = vlaneseq
    %v665 = vshrl.u32 %v664, 7
    %v666 = vsub.s32 7, %v665
    %v667 = vrot.slane %v108, %v666
    %v668 = vmul.f32 %v660, %v667
    %v669 = vmul.f32 %v661, %v667
    %v670 = vmul.f32 %v662, %v667
    %v671 = vmul.f32 %v663, %v667
    %v672 = vlaneseq
    %v673 = vshrl.u32 %v672, 7
    %v674 = vsub.s32 0, %v673
    %v675 = vrot.slane %v109, %v674
    %v676 = vadd.f32 %v668, %v675
    %v677 = vadd.f32 %v669, %v675
    %v678 = vadd.f32 %v670, %v675
    %v679 = vadd.f32 %v671, %v675
    %v680 = vpack.c.bf16 %v677, %v676
    %v681 = vpack.c.bf16 %v679, %v678
    %v682 = vlaneseq
    %v683 = vshrl.u32 %v682, 7
    %v684 = vsub.s32 4, %v683
    %v685 = vrot.slane %v108, %v684
    %v702 = vunpack.c.l.b16 %v40
    %v703 = vunpack.c.l.b16 %v44
    %v704 = vunpack.c.l.b16 %v48
    %v705 = vunpack.c.l.b16 %v52
    %v706 = vunpack.c.l.b16 %v56
    %v707 = vunpack.c.l.b16 %v60
    %v708 = vunpack.c.l.b16 %v64
    %v709 = vunpack.c.l.b16 %v68
    %v710 = vunpack.c.l.b16 %v72
    %v711 = vunpack.c.l.b16 %v76
    %v712 = vunpack.c.l.b16 %v80
    %v713 = vunpack.c.l.b16 %v84
    %v714 = vunpack.c.l.b16 %v88
    %v715 = vunpack.c.l.b16 %v92
    %v716 = vunpack.c.l.b16 %v96
    %v717 = vunpack.c.l.b16 %v100
    %v718 = vpack.c.b16 %v703, %v702
    %v719 = vpack.c.b16 %v705, %v704
    %v720 = vpack.c.b16 %v707, %v706
    %v721 = vpack.c.b16 %v709, %v708
    %v722 = vpack.c.b16 %v711, %v710
    %v723 = vpack.c.b16 %v713, %v712
    %v724 = vpack.c.b16 %v715, %v714
    %v725 = vpack.c.b16 %v717, %v716
    %734 = vmatprep.subr.bf16.mxu0 0
    %735 = vmatpush1.bf16.msra.mxu0 %v718
    %736 = vmatprep.subr.bf16.mxu0 0
    %737 = vmatpush1.bf16.msra.mxu0 %v719
    %738 = vmatprep.subr.bf16.mxu0 0
    %739 = vmatpush1.bf16.msra.mxu0 %v720
    %740 = vmatprep.subr.bf16.mxu0 0
    %741 = vmatpush1.bf16.msra.mxu0 %v721
    %742 = vmatprep.subr.bf16.mxu0 0
    %743 = vmatpush1.bf16.msra.mxu0 %v722
    %744 = vmatprep.subr.bf16.mxu0 0
    %745 = vmatpush1.bf16.msra.mxu0 %v723
    %746 = vmatprep.subr.bf16.mxu0 0
    %747 = vmatpush1.bf16.msra.mxu0 %v724
    %748 = vmatprep.subr.bf16.mxu0 0
    %749 = vmatpush1.bf16.msra.mxu0 %v725
    %750 = vmatprep.subr.bf16.mxu0 0
    %751 = vmatpush1.bf16.msra.mxu0 0
    %752 = vmatprep.subr.bf16.mxu0 0
    %753 = vmatpush1.bf16.msra.mxu0 0
    %754 = vmatprep.subr.bf16.mxu0 0
    %755 = vmatpush1.bf16.msra.mxu0 0
    %756 = vmatprep.subr.bf16.mxu0 0
    %757 = vmatpush1.bf16.msra.mxu0 0
    %758 = vmatprep.subr.bf16.mxu0 0
    %759 = vmatpush1.bf16.msra.mxu0 0
    %760 = vmatprep.subr.bf16.mxu0 0
    %761 = vmatpush1.bf16.msra.mxu0 0
    %762 = vmatprep.subr.bf16.mxu0 0
    %763 = vmatpush1.bf16.msra.mxu0 0
    %764 = vmatprep.subr.bf16.mxu0 0
    %765 = vmatpush1.bf16.msra.mxu0 0
    %766 = vmatprep.mubr.bf16.mxu0 0
    %767 = vmatmul.mubr.bf16.gmra.mrb[0].mxu0 %v680
    %v768 = vpop.f32.mrb[0].mxu0
    %v769 = vadd.f32 %v685, %v768
    %v770 = vpop.f32.mrb[0].mxu0
    %v771 = vpop.f32.mrb[0].mxu0
    %v772 = vadd.f32 %v685, %v771
    %v773 = vpop.f32.mrb[0].mxu0
    %774 = vmatprep.mubr.bf16.mxu0 0
    %775 = vmatmul.mubr.bf16.gmra.mrb[0].mxu0 %v681
    %v776 = vpop.f32.mrb[0].mxu0
    %v777 = vadd.f32 %v685, %v776
    %v778 = vpop.f32.mrb[0].mxu0
    %v779 = vpop.f32.mrb[0].mxu0
    %v780 = vadd.f32 %v685, %v779
    %v781 = vpop.f32.mrb[0].mxu0
    %782 = vdwg.mxu0
    %v783 = vmul.f32 %v769, %v769
    %v784 = vmul.f32 %v772, %v772
    %v785 = vmul.f32 %v777, %v777
    %v786 = vmul.f32 %v780, %v780
    %v787 = vmul.f32 %v769, %v783
    %v788 = vmul.f32 %v772, %v784
    %v789 = vmul.f32 %v777, %v785
    %v790 = vmul.f32 %v780, %v786
    %v791 = vmul.f32 %v787, 0.044715
    %v792 = vmul.f32 %v788, 0.044715
    %v793 = vmul.f32 %v789, 0.044715
    %v794 = vmul.f32 %v790, 0.044715
    %v795 = vadd.f32 %v769, %v791
    %v796 = vadd.f32 %v772, %v792
    %v797 = vadd.f32 %v777, %v793
    %v798 = vadd.f32 %v780, %v794
    %v799 = vmul.f32 %v795, 0.7978846
    %v800 = vmul.f32 %v796, 0.7978846
    %v801 = vmul.f32 %v797, 0.7978846
    %v802 = vmul.f32 %v798, 0.7978846
    %v803 = vtanh.pop %v799
    %v804 = vtanh.pop %v800
    %v805 = vtanh.pop %v801
    %v806 = vtanh.pop %v802
    %v807 = vadd.f32 %v803, 1.0
    %v808 = vadd.f32 %v804, 1.0
    %v809 = vadd.f32 %v805, 1.0
    %v810 = vadd.f32 %v806, 1.0
    %v811 = vmul.f32 %v807, 0.5
    %v812 = vmul.f32 %v808, 0.5
    %v813 = vmul.f32 %v809, 0.5
    %v814 = vmul.f32 %v810, 0.5
    %v815 = vmul.f32 %v769, %v811
    %v816 = vmul.f32 %v772, %v812
    %v817 = vmul.f32 %v777, %v813
    %v818 = vmul.f32 %v780, %v814
    %v819 = vpack.c.bf16 %v816, %v815
    %v820 = vpack.c.bf16 %v818, %v817
    %v821 = vlaneseq
    %v822 = vshrl.u32 %v821, 7
    %v823 = vsub.s32 5, %v822
    %v824 = vrot.slane %v108, %v823
    %v825 = vunpack.c.h.b16 %v40
    %v826 = vunpack.c.h.b16 %v44
    %v827 = vunpack.c.h.b16 %v48
    %v828 = vunpack.c.h.b16 %v52
    %v829 = vunpack.c.h.b16 %v56
    %v830 = vunpack.c.h.b16 %v60
    %v831 = vunpack.c.h.b16 %v64
    %v832 = vunpack.c.h.b16 %v68
    %v833 = vunpack.c.h.b16 %v72
    %v834 = vunpack.c.h.b16 %v76
    %v835 = vunpack.c.h.b16 %v80
    %v836 = vunpack.c.h.b16 %v84
    %v837 = vunpack.c.h.b16 %v88
    %v838 = vunpack.c.h.b16 %v92
    %v839 = vunpack.c.h.b16 %v96
    %v840 = vunpack.c.h.b16 %v100
    %v841 = vpack.c.b16 %v826, %v825
    %v842 = vpack.c.b16 %v828, %v827
    %v843 = vpack.c.b16 %v830, %v829
    %v844 = vpack.c.b16 %v832, %v831
    %v845 = vpack.c.b16 %v834, %v833
    %v846 = vpack.c.b16 %v836, %v835
    %v847 = vpack.c.b16 %v838, %v837
    %v848 = vpack.c.b16 %v840, %v839
    %857 = vmatprep.subr.bf16.mxu0 0
    %858 = vmatpush1.bf16.msra.mxu0 %v841
    %859 = vmatprep.subr.bf16.mxu0 0
    %860 = vmatpush1.bf16.msra.mxu0 %v842
    %861 = vmatprep.subr.bf16.mxu0 0
    %862 = vmatpush1.bf16.msra.mxu0 %v843
    %863 = vmatprep.subr.bf16.mxu0 0
    %864 = vmatpush1.bf16.msra.mxu0 %v844
    %865 = vmatprep.subr.bf16.mxu0 0
    %866 = vmatpush1.bf16.msra.mxu0 %v845
    %867 = vmatprep.subr.bf16.mxu0 0
    %868 = vmatpush1.bf16.msra.mxu0 %v846
    %869 = vmatprep.subr.bf16.mxu0 0
    %870 = vmatpush1.bf16.msra.mxu0 %v847
    %871 = vmatprep.subr.bf16.mxu0 0
    %872 = vmatpush1.bf16.msra.mxu0 %v848
    %873 = vmatprep.subr.bf16.mxu0 0
    %874 = vmatpush1.bf16.msra.mxu0 0
    %875 = vmatprep.subr.bf16.mxu0 0
    %876 = vmatpush1.bf16.msra.mxu0 0
    %877 = vmatprep.subr.bf16.mxu0 0
    %878 = vmatpush1.bf16.msra.mxu0 0
    %879 = vmatprep.subr.bf16.mxu0 0
    %880 = vmatpush1.bf16.msra.mxu0 0
    %881 = vmatprep.subr.bf16.mxu0 0
    %882 = vmatpush1.bf16.msra.mxu0 0
    %883 = vmatprep.subr.bf16.mxu0 0
    %884 = vmatpush1.bf16.msra.mxu0 0
    %885 = vmatprep.subr.bf16.mxu0 0
    %886 = vmatpush1.bf16.msra.mxu0 0
    %887 = vmatprep.subr.bf16.mxu0 0
    %888 = vmatpush1.bf16.msra.mxu0 0
    %889 = vmatprep.mubr.bf16.mxu0 0
    %890 = vmatmul.mubr.bf16.gmra.mrb[0].mxu0 %v819
    %v891 = vpop.f32.mrb[0].mxu0
    %v892 = vadd.f32 %v824, %v891
    %v893 = vpop.f32.mrb[0].mxu0
    %v894 = vpop.f32.mrb[0].mxu0
    %v895 = vadd.f32 %v824, %v894
    %v896 = vpop.f32.mrb[0].mxu0
    %897 = vmatprep.mubr.bf16.mxu0 0
    %898 = vmatmul.mubr.bf16.gmra.mrb[0].mxu0 %v820
    %v899 = vpop.f32.mrb[0].mxu0
    %v900 = vadd.f32 %v824, %v899
    %v901 = vpop.f32.mrb[0].mxu0
    %v902 = vpop.f32.mrb[0].mxu0
    %v903 = vadd.f32 %v824, %v902
    %v904 = vpop.f32.mrb[0].mxu0
    %905 = vdwg.mxu0
    %v906 = vadd.f32 %v676, %v892
    %v907 = vadd.f32 %v677, %v895
    %v908 = vadd.f32 %v678, %v900
    %v909 = vadd.f32 %v679, %v903
    %910 = vadd.xlane.f32.xlu0 %v906
    %v911 = vpop.xlane.xlu0 %910
    %912 = vadd.xlane.f32.xlu0 %v907
    %v913 = vpop.xlane.xlu0 %912
    %914 = vadd.xlane.f32.xlu0 %v908
    %v915 = vpop.xlane.xlu0 %914
    %916 = vadd.xlane.f32.xlu0 %v909
    %v917 = vpop.xlane.xlu0 %916
    %v918 = vmul.f32 %v911, 0.03125
    %v919 = vmul.f32 %v913, 0.03125
    %v920 = vmul.f32 %v915, 0.03125
    %v921 = vmul.f32 %v917, 0.03125
    %v922 = vsub.f32 %v906, %v918
    %v923 = vsub.f32 %v907, %v919
    %v924 = vsub.f32 %v908, %v920
    %v925 = vsub.f32 %v909, %v921
    %v926 = vmul.f32 %v922, %v631
    %v927 = vmul.f32 %v923, %v631
    %v928 = vmul.f32 %v924, %v631
    %v929 = vmul.f32 %v925, %v631
    %v930 = vmul.f32 %v926, %v926
    %v931 = vmul.f32 %v927, %v927
    %v932 = vmul.f32 %v928, %v928
    %v933 = vmul.f32 %v929, %v929
    %934 = vadd.xlane.f32.xlu0 %v930
    %v935 = vpop.xlane.xlu0 %934
    %936 = vadd.xlane.f32.xlu0 %v931
    %v937 = vpop.xlane.xlu0 %936
    %938 = vadd.xlane.f32.xlu0 %v932
    %v939 = vpop.xlane.xlu0 %938
    %940 = vadd.xlane.f32.xlu0 %v933
    %v941 = vpop.xlane.xlu0 %940
    %v942 = vmul.f32 %v935, 0.03125
    %v943 = vmul.f32 %v937, 0.03125
    %v944 = vmul.f32 %v939, 0.03125
    %v945 = vmul.f32 %v941, 0.03125
    %v946 = vadd.f32 %v942, 1e-12
    %v947 = vadd.f32 %v943, 1e-12
    %v948 = vadd.f32 %v944, 1e-12
    %v949 = vadd.f32 %v945, 1e-12
    %v950 = vrsqrt.pop %v946
    %v951 = vrsqrt.pop %v947
    %v952 = vrsqrt.pop %v948
    %v953 = vrsqrt.pop %v949
    %v954 = vmul.f32 %v922, %v950
    %v955 = vmul.f32 %v923, %v951
    %v956 = vmul.f32 %v924, %v952
    %v957 = vmul.f32 %v925, %v953
    %v958 = vlaneseq
    %v959 = vshrl.u32 %v958, 7
    %v960 = vsub.s32 1, %v959
    %v961 = vrot.slane %v109, %v960
    %v962 = vmul.f32 %v954, %v961
    %v963 = vmul.f32 %v955, %v961
    %v964 = vmul.f32 %v956, %v961
    %v965 = vmul.f32 %v957, %v961
    %v966 = vlaneseq
    %v967 = vshrl.u32 %v966, 7
    %v968 = vsub.s32 2, %v967
    %v969 = vrot.slane %v109, %v968
    %v970 = vadd.f32 %v962, %v969
    %v971 = vadd.f32 %v963, %v969
    %v972 = vadd.f32 %v964, %v969
    %v973 = vadd.f32 %v965, %v969
    %v975 = vsel %vm417, %v106, 0
    %977 = vmatprep.subr.mxu0 0.0
    %978 = vmatpush1.msra.mxu0 %v970
    %979 = vmatprep.subr.mxu0 0.0
    %980 = vmatpush1.msra.mxu0 %v971
    %981 = vmatprep.subr.mxu0 0.0
    %982 = vmatpush1.msra.mxu0 %v972
    %983 = vmatprep.subr.mxu0 0.0
    %984 = vmatpush1.msra.mxu0 %v973
    %985 = vmatprep.subr.mxu0 0.0
    %986 = vmatpush1.msra.mxu0 0.0
    %987 = vmatprep.subr.mxu0 0.0
    %988 = vmatpush1.msra.mxu0 0.0
    %989 = vmatprep.subr.mxu0 0.0
    %990 = vmatpush1.msra.mxu0 0.0
    %991 = vmatprep.subr.mxu0 0.0
    %992 = vmatpush1.msra.mxu0 0.0
    %993 = vmatprep.subr.mxu0 0.0
    %994 = vmatpush1.msra.mxu0 0.0
    %995 = vmatprep.subr.mxu0 0.0
    %996 = vmatpush1.msra.mxu0 0.0
    %997 = vmatprep.subr.mxu0 0.0
    %998 = vmatpush1.msra.mxu0 0.0
    %999 = vmatprep.subr.mxu0 0.0
    %1000 = vmatpush1.msra.mxu0 0.0
    %1001 = vmatprep.subr.mxu0 0.0
    %1002 = vmatpush1.msra.mxu0 0.0
    %1003 = vmatprep.subr.mxu0 0.0
    %1004 = vmatpush1.msra.mxu0 0.0
    %1005 = vmatprep.subr.mxu0 0.0
    %1006 = vmatpush1.msra.mxu0 0.0
    %1007 = vmatprep.subr.mxu0 0.0
    %1008 = vmatpush1.msra.mxu0 0.0
    %1009 = vmatprep.subr.mxu0 0.0
    %1010 = vmatpush1.msra.mxu0 0.0
    %1011 = vmatprep.subr.mxu0 0.0
    %1012 = vmatpush1.msra.mxu0 0.0
    %1013 = vmatprep.subr.mxu0 0.0
    %1014 = vmatpush1.msra.mxu0 0.0
    %1015 = vmatprep.subr.mxu0 0.0
    %1016 = vmatpush1.msra.mxu0 0.0
    %1017 = vmatprep.subr.mxu0 0.0
    %1018 = vmatpush1.msra.mxu0 0.0
    %1019 = vmatprep.subr.mxu0 0.0
    %1020 = vmatpush1.msra.mxu0 0.0
    %1021 = vmatprep.subr.mxu0 0.0
    %1022 = vmatpush1.msra.mxu0 0.0
    %1023 = vmatprep.subr.mxu0 0.0
    %1024 = vmatpush1.msra.mxu0 0.0
    %1025 = vmatprep.subr.mxu0 0.0
    %1026 = vmatpush1.msra.mxu0 0.0
    %1027 = vmatprep.subr.mxu0 0.0
    %1028 = vmatpush1.msra.mxu0 0.0
    %1029 = vmatprep.subr.mxu0 0.0
    %1030 = vmatpush1.msra.mxu0 0.0
    %1031 = vmatprep.subr.mxu0 0.0
    %1032 = vmatpush1.msra.mxu0 0.0
    %1033 = vmatprep.subr.mxu0 0.0
    %1034 = vmatpush1.msra.mxu0 0.0
    %1035 = vmatprep.subr.mxu0 0.0
    %1036 = vmatpush1.msra.mxu0 0.0
    %1037 = vmatprep.subr.mxu0 0.0
    %1038 = vmatpush1.msra.mxu0 0.0
    %1039 = vmatprep.subr.mxu0 0.0
    %1040 = vmatpush1.msra.mxu0 0.0
    %1041 = vmatprep.mubr.f32.mxu0 0.0
    %1042 = vmatmul.mubr.f32.gmra.mrb[0].mxu0 %v975
    %v1043 = vpop.f32.mrb[0].mxu0
    %v1044 = vadd.f32 0.0, %v1043
    %v1045 = vpop.f32.mrb[0].mxu0
    %1046 = vdwg.mxu0
    %v1047 = vpack.c.bf16 %v1044, %v1044
    %v1048 = vlaneseq
    %v1049 = vshrl.u32 %v1048, 7
    %v1050 = vsub.s32 6, %v1049
    %v1051 = vrot.slane %v108, %v1050
    %v1068 = vunpack.c.l.b16 %v41
    %v1069 = vunpack.c.l.b16 %v45
    %v1070 = vunpack.c.l.b16 %v49
    %v1071 = vunpack.c.l.b16 %v53
    %v1072 = vunpack.c.l.b16 %v57
    %v1073 = vunpack.c.l.b16 %v61
    %v1074 = vunpack.c.l.b16 %v65
    %v1075 = vunpack.c.l.b16 %v69
    %v1076 = vunpack.c.l.b16 %v73
    %v1077 = vunpack.c.l.b16 %v77
    %v1078 = vunpack.c.l.b16 %v81
    %v1079 = vunpack.c.l.b16 %v85
    %v1080 = vunpack.c.l.b16 %v89
    %v1081 = vunpack.c.l.b16 %v93
    %v1082 = vunpack.c.l.b16 %v97
    %v1083 = vunpack.c.l.b16 %v101
    %v1084 = vpack.c.b16 %v1069, %v1068
    %v1085 = vpack.c.b16 %v1071, %v1070
    %v1086 = vpack.c.b16 %v1073, %v1072
    %v1087 = vpack.c.b16 %v1075, %v1074
    %v1088 = vpack.c.b16 %v1077, %v1076
    %v1089 = vpack.c.b16 %v1079, %v1078
    %v1090 = vpack.c.b16 %v1081, %v1080
    %v1091 = vpack.c.b16 %v1083, %v1082
    %1100 = vmatprep.subr.bf16.mxu0 0
    %1101 = vmatpush1.bf16.msra.mxu0 %v1084
    %1102 = vmatprep.subr.bf16.mxu0 0
    %1103 = vmatpush1.bf16.msra.mxu0 %v1085
    %1104 = vmatprep.subr.bf16.mxu0 0
    %1105 = vmatpush1.bf16.msra.mxu0 %v1086
    %1106 = vmatprep.subr.bf16.mxu0 0
    %1107 = vmatpush1.bf16.msra.mxu0 %v1087
    %1108 = vmatprep.subr.bf16.mxu0 0
    %1109 = vmatpush1.bf16.msra.mxu0 %v1088
    %1110 = vmatprep.subr.bf16.mxu0 0
    %1111 = vmatpush1.bf16.msra.mxu0 %v1089
    %1112 = vmatprep.subr.bf16.mxu0 0
    %1113 = vmatpush1.bf16.msra.mxu0 %v1090
    %1114 = vmatprep.subr.bf16.mxu0 0
    %1115 = vmatpush1.bf16.msra.mxu0 %v1091
    %1116 = vmatprep.subr.bf16.mxu0 0
    %1117 = vmatpush1.bf16.msra.mxu0 0
    %1118 = vmatprep.subr.bf16.mxu0 0
    %1119 = vmatpush1.bf16.msra.mxu0 0
    %1120 = vmatprep.subr.bf16.mxu0 0
    %1121 = vmatpush1.bf16.msra.mxu0 0
    %1122 = vmatprep.subr.bf16.mxu0 0
    %1123 = vmatpush1.bf16.msra.mxu0 0
    %1124 = vmatprep.subr.bf16.mxu0 0
    %1125 = vmatpush1.bf16.msra.mxu0 0
    %1126 = vmatprep.subr.bf16.mxu0 0
    %1127 = vmatpush1.bf16.msra.mxu0 0
    %1128 = vmatprep.subr.bf16.mxu0 0
    %1129 = vmatpush1.bf16.msra.mxu0 0
    %1130 = vmatprep.subr.bf16.mxu0 0
    %1131 = vmatpush1.bf16.msra.mxu0 0
    %1132 = vmatprep.mubr.bf16.mxu0 0
    %1133 = vmatmul.mubr.bf16.gmra.mrb[0].mxu0 %v1047
    %v1134 = vpop.f32.mrb[0].mxu0
    %v1135 = vadd.f32 %v1051, %v1134
    %v1136 = vpop.f32.mrb[0].mxu0
    %v1137 = vpop.f32.mrb[0].mxu0
    %v1138 = vpop.f32.mrb[0].mxu0
    %1139 = vdwg.mxu0
    %1140 = vmax.xlane.f32.xlu0 %v1135
    %v1141 = vpop.xlane.xlu0 %1140
    %v1142 = vsub.f32 %v1135, %v1141
    %v1143 = vmul.f32 %v1142, 1.442695
    %v1144 = vpow.pop %v1143
    %1145 = vadd.xlane.f32.xlu0 %v1144
    %v1146 = vpop.xlane.xlu0 %1145
    %v1147 = vlog2.pop %v1146
    %v1148 = vmul.f32 %v1147, 0.6931472
    %v1149 = vadd.f32 %v1141, %v1148
    %v1150 = vmul.f32 %v107, %v1135
    %1151 = vadd.xlane.f32.xlu0 %v1150
    %v1152 = vpop.xlane.xlu0 %1151
    %1153 = vadd.xlane.f32.xlu0 %v107
    %v1154 = vpop.xlane.xlu0 %1153
    %v1155 = vsub.f32 %v1149, %v1152
    %v1156 = vmul.f32 %v1155, %v1154
    %vm1157 = vcmask 7168
    %v1158 = vsel %vm1157, %v1156, 0.0
    %1159 = vadd.xlane.f32.xlu0 %v1158
    %v1160 = vpop.xlane.xlu0 %1159
    %v1161 = vrot.slane %v1160, 4
    %v1162 = vadd.f32 %v1160, %v1161
    %v1163 = vrot.slane %v1162, 2
    %v1164 = vadd.f32 %v1162, %v1163
    %v1165 = vrot.slane %v1164, 1
    %v1166 = vadd.f32 %v1164, %v1165
    %s1167 = vtos %v1166
    %s1168 = smul.f32 %s1167, 0.16666667
    %v1169 = vlaneseq
    %v1170 = vshrl.u32 %v1169, 7
    %vm1171 = vcmp.eq.s32.totalorder %v1170, 7
    %v1172 = vstv %s1168
    %v1173 = vsel %vm1171, %v1172, %v1135
    %1174 = vst [vmem:[%s4] sm:$0xff] %v1173
    // Predicated region
    $region22: #{tagger_forward.1} parent=1 // pred_check
      _
    $region23: #{tagger_forward.1} parent=1 // pred_check_branch
      %1176 = sbr.rel (0) target = $region25
    $region24: #{tagger_forward.1} parent=1 // pred_region
      _
    $region25: #{tagger_forward.1} parent=1 // pred_fallthru
      _
    // Predicated region
    $region26: #{tagger_forward.1} parent=1 // pred_check
      _
    $region27: #{tagger_forward.1} parent=1 // pred_check_branch
      %1178 = sbr.rel (0) target = $region29
    $region28: #{tagger_forward.1} parent=1 // pred_region
      _
    $region29: #{tagger_forward.1} parent=1 // pred_fallthru
      _
    %1179 = vsyncpa [#allocation3], 1

</llo_original>
